<compile_context>
chip_gen: v7x
topology: tpu7x:2x2x1
jax: 0.10.0
libtpu: 0.0.40
codegen_flags: <defaults>
</compile_context>

<pallas_src>
import functools

import jax
import jax.numpy as jnp
from jax.experimental import pallas as pl
from jax.experimental.pallas import tpu as pltpu

_VMEM_LIMIT = 32 * 1024 * 1024  # within physical VMEM on v5e/v6e (128 MiB) and v7x (64 MiB/TC)


def _round_up(v, m):
    return -(-v // m) * m


def _conv_leaky_ncs(x, w_ref, mask_ref, b_ref, *, Nb, C, Cout, K, W, S, pad, slope):
    """x: (Nb, C, S) f32 block (S = H*W on lanes).
    Returns LeakyReLU(conv3x3 + bias) as an (Nb, Cout, S) f32 value (VMEM/vregs)."""
    acc = jnp.zeros((Nb, Cout, S), jnp.float32)
    t = 0
    for ky in range(K):
        for kx in range(K):
            d = (ky - pad) * W + (kx - pad)            # flattened source offset
            if d == 0:
                x_tap = x                              # center tap: no shift, mask == 1
            else:
                # rolled[s] = x[s + d]; lanes that wrapped across the image border are
                # zeroed by the precomputed mask (so no padded scratch is needed).
                rolled = pltpu.roll(x, (-d) % S, axis=2)
                x_tap = rolled * mask_ref[t].reshape(1, 1, S)
            # Tiny per-tap weight, broadcast over the batch block for a batched matmul.
            w_tap = jnp.broadcast_to(w_ref[t], (Nb, Cout, C))
            acc = acc + jax.lax.dot_general(
                w_tap, x_tap, (((2,), (1,)), ((0,), (0,))),
                preferred_element_type=jnp.float32)    # (Nb, Cout, S)
            t += 1
    y = acc + b_ref[...].reshape(1, Cout, 1)
    return jnp.where(y > 0, y, slope * y)              # LeakyReLU(negative_slope)


def _conv_stats_kernel(x_ref, w_ref, b_ref, mask_ref, y_ref, sum_ref, m2_ref,
                       *, Nb, C, Cout, K, W, S, pad, slope):
    y = _conv_leaky_ncs(x_ref[...], w_ref, mask_ref, b_ref,
                        Nb=Nb, C=C, Cout=Cout, K=K, W=W, S=S, pad=pad, slope=slope)
    y_ref[...] = y                                      # lane-dense (Nb, Cout, S) store
    cnt = float(Nb * S)
    s = jnp.sum(y, axis=(0, 2))                         # (Cout,) per-block sum
    mean_b = (s * (1.0 / cnt)).reshape(1, Cout, 1)
    m2 = jnp.sum(jnp.square(y - mean_b), axis=(0, 2))   # per-block centered 2nd moment
    sum_ref[...] = s.reshape(1, 1, Cout)
    m2_ref[...] = m2.reshape(1, 1, Cout)


def _bn_apply_kernel(y_ref, scale_ref, shift_ref, o_ref, *, Cout):
    scale = scale_ref[...].reshape(1, Cout, 1)
    shift = shift_ref[...].reshape(1, Cout, 1)
    o_ref[...] = y_ref[...] * scale + shift             # one FMA per element, in place


def _pick_batch_block(N, C, Cout, S, budget_bytes=12 * 1024 * 1024):
    """Largest divisor of N whose (8,128)-padded per-step VMEM working set fits a
    conservative budget, capped so NBLK >= 2 (v7x megacore / pipeline overlap)."""
    lane = _round_up(S, 128)
    c_in, c_out = _round_up(C, 8), _round_up(Cout, 8)
    # 2x double-buffered input block + 2x double-buffered y block + f32 accumulator
    # + ~2 live tap temporaries (all f32, lane/sublane padded).
    per_img = 4 * lane * (2 * c_in + 2 * c_out + c_out + 2 * c_in)
    nb = max(1, min(N, budget_bytes // max(per_img, 1)))
    if N >= 2:
        nb = min(nb, N // 2)
    nb = max(1, nb)
    while N % nb:
        nb -= 1
    return nb


@functools.partial(jax.jit, static_argnames=("negative_slope", "eps"))
def conv_bridge_block(x_nchw, weight_oihw, bias, gamma, beta, *,
                      negative_slope=0.01, eps=1e-5):
    N, C, H, W = x_nchw.shape
    Cout = weight_oihw.shape[0]
    K = weight_oihw.shape[-1]
    pad = (K - 1) // 2
    S = H * W

    # Free layout glue: NCHW -> (N, C, H*W).  No HBM transposes in or out.
    x = x_nchw.reshape(N, C, S).astype(jnp.float32)
    # (O, I, Kh, Kw) -> (Kh*Kw, O, I): tap-major so the kernel indexes only a major axis.
    w_taps = jnp.transpose(weight_oihw, (2, 3, 0, 1)).astype(jnp.float32).reshape(K * K, Cout, C)
    b_col = bias.reshape(Cout, 1).astype(jnp.float32)

    # Per-tap border-validity masks in the flattened spatial domain (tiny: (K*K, S)).
    hh = jnp.arange(H, dtype=jnp.int32).reshape(H, 1)
    ww = jnp.arange(W, dtype=jnp.int32).reshape(1, W)
    mask_list = []
    for ky in range(K):
        for kx in range(K):
            valid = ((hh + (ky - pad) >= 0) & (hh + (ky - pad) < H) &
                     (ww + (kx - pad) >= 0) & (ww + (kx - pad) < W))
            mask_list.append(valid.reshape(S))
    masks = jnp.stack(mask_list, axis=0).astype(jnp.float32)      # (K*K, S)

    Nb = _pick_batch_block(N, C, Cout, S)
    NBLK = N // Nb

    cparams = pltpu.CompilerParams(dimension_semantics=("parallel",),
                                   vmem_limit_bytes=_VMEM_LIMIT)

    # -------- pass 1: conv + bias + LeakyReLU -> y (HBM) + per-block stat partials ----
    stats_fn = pl.pallas_call(
        functools.partial(_conv_stats_kernel, Nb=Nb, C=C, Cout=Cout, K=K, W=W, S=S,
                          pad=pad, slope=negative_slope),
        out_shape=(
            jax.ShapeDtypeStruct((N, Cout, S), jnp.float32),      # y = LeakyReLU(conv)
            jax.ShapeDtypeStruct((NBLK, 1, Cout), jnp.float32),   # per-block sum
            jax.ShapeDtypeStruct((NBLK, 1, Cout), jnp.float32),   # per-block centered M2
        ),
        grid=(NBLK,),
        in_specs=[
            pl.BlockSpec((Nb, C, S), lambda n: (n, 0, 0)),
            pl.BlockSpec((K * K, Cout, C), lambda n: (0, 0, 0)),
            pl.BlockSpec((Cout, 1), lambda n: (0, 0)),
            pl.BlockSpec((K * K, S), lambda n: (0, 0)),
        ],
        out_specs=(
            pl.BlockSpec((Nb, Cout, S), lambda n: (n, 0, 0)),
            pl.BlockSpec((1, 1, Cout), lambda n: (n, 0, 0)),
            pl.BlockSpec((1, 1, Cout), lambda n: (n, 0, 0)),
        ),
        compiler_params=cparams,
    )
    y, psum, pm2 = stats_fn(x, w_taps, b_col, masks)

    # ------ combine per-block partials (Chan merge) + hoist BN constants (tiny math) ---
    blk_cnt = float(Nb * S)
    tot_cnt = float(N * S)
    mean = jnp.sum(psum, axis=0) / tot_cnt                        # (1, Cout)
    blk_mean = psum / blk_cnt                                     # (NBLK, 1, Cout)
    m2 = jnp.sum(pm2, axis=0) + jnp.sum(blk_cnt * jnp.square(blk_mean - mean), axis=0)
    var = m2 / tot_cnt                                            # biased var (PyTorch BN)
    scale = gamma.reshape(1, Cout).astype(jnp.float32) * jax.lax.rsqrt(var + eps)
    shift = beta.reshape(1, Cout).astype(jnp.float32) - mean * scale
    scale_c = scale.reshape(Cout, 1)
    shift_c = shift.reshape(Cout, 1)

    # -------- pass 2: streaming BN FMA over y, written in place (aliased) -------------
    apply_fn = pl.pallas_call(
        functools.partial(_bn_apply_kernel, Cout=Cout),
        out_shape=jax.ShapeDtypeStruct((N, Cout, S), jnp.float32),
        grid=(NBLK,),
        in_specs=[
            pl.BlockSpec((Nb, Cout, S), lambda n: (n, 0, 0)),
            pl.BlockSpec((Cout, 1), lambda n: (0, 0)),
            pl.BlockSpec((Cout, 1), lambda n: (0, 0)),
        ],
        out_specs=pl.BlockSpec((Nb, Cout, S), lambda n: (n, 0, 0)),
        input_output_aliases={0: 0},
        compiler_params=cparams,
    )
    out = apply_fn(y, scale_c, shift_c)
    return out.reshape(N, Cout, H, W)


def _reference(x_nchw, weight_oihw, bias, gamma, beta, *, eps=1e-5, slope=0.01):
    y = jax.lax.conv_general_dilated(
        x_nchw, weight_oihw, window_strides=(1, 1), padding=((1, 1), (1, 1)),
        dimension_numbers=("NCHW", "OIHW", "NCHW"))
    y = y + bias.reshape(1, -1, 1, 1)
    y = jnp.where(y > 0, y, slope * y)
    mean = jnp.mean(y, axis=(0, 2, 3), keepdims=True)
    var = jnp.mean((y - mean) ** 2, axis=(0, 2, 3), keepdims=True)
    return (y - mean) / jnp.sqrt(var + eps) * gamma.reshape(1, -1, 1, 1) + beta.reshape(1, -1, 1, 1)


if __name__ == "__main__":
    key = jax.random.PRNGKey(0)
    kx, kw, kb = jax.random.split(key, 3)

    N, C, H, W = 2, 4, 16, 16
    K = 3
    x = jax.random.normal(kx, (N, C, H, W), jnp.float32)

    # Deterministic parameter init (PyTorch-style: Conv2d uniform, BN gamma=1 beta=0).
    fan_in = C * K * K
    bound = 1.0 / (fan_in ** 0.5)
    weight = jax.random.uniform(kw, (C, C, K, K), jnp.float32, -bound, bound)   # OIHW
    bias = jax.random.uniform(kb, (C,), jnp.float32, -bound, bound)
    gamma = jnp.ones((C,), jnp.float32)
    beta = jnp.zeros((C,), jnp.float32)

    out = conv_bridge_block(x, weight, bias, gamma, beta)
    out = jax.block_until_ready(out)

    ref = _reference(x, weight, bias, gamma, beta)
    assert out.shape == (N, C, H, W)
    max_err = float(jnp.max(jnp.abs(out - ref)))
    assert jnp.allclose(out, ref, atol=1e-4, rtol=1e-4), f"max_err={max_err}"
    print("KERNEL_OK")
</pallas_src>

<mosaic_0001>
module attributes {stable_mosaic.version = 11 : i64} {
  func.func @_bn_apply_kernel(%arg0: i32, %arg1: memref<1x4x256xf32, #tpu.memory_space<vmem>>, %arg2: memref<4x1xf32, #tpu.memory_space<vmem>>, %arg3: memref<4x1xf32, #tpu.memory_space<vmem>>, %arg4: memref<1x4x256xf32, #tpu.memory_space<vmem>>) attributes {dimension_semantics = [#tpu.dimension_semantics<parallel>], iteration_bounds = array<i64: 2>, scalar_prefetch = 0 : i64, scratch_operands = 0 : i64, tpu.core_type = #tpu.core_type<tc>, window_params = [{transform_indices = @transform_0, window_bounds = array<i64: 1, 4, 256>}, {pipeline_mode = #tpu.pipeline_mode<synchronous>, transform_indices = @transform_1, window_bounds = array<i64: 4, 1>}, {pipeline_mode = #tpu.pipeline_mode<synchronous>, transform_indices = @transform_2, window_bounds = array<i64: 4, 1>}, {transform_indices = @transform_3, window_bounds = array<i64: 1, 4, 256>}]} {
    %c0 = arith.constant 0 : index
    %c0_0 = arith.constant 0 : index
    %0 = vector.load %arg2[%c0, %c0_0] : memref<4x1xf32, #tpu.memory_space<vmem>>, vector<4x1xf32>
    %1 = vector.shape_cast %0 : vector<4x1xf32> to vector<1x4x1xf32>
    %c0_1 = arith.constant 0 : index
    %c0_2 = arith.constant 0 : index
    %2 = vector.load %arg3[%c0_1, %c0_2] : memref<4x1xf32, #tpu.memory_space<vmem>>, vector<4x1xf32>
    %3 = vector.shape_cast %2 : vector<4x1xf32> to vector<1x4x1xf32>
    %c0_3 = arith.constant 0 : index
    %c0_4 = arith.constant 0 : index
    %c0_5 = arith.constant 0 : index
    %4 = vector.load %arg1[%c0_3, %c0_4, %c0_5] : memref<1x4x256xf32, #tpu.memory_space<vmem>>, vector<1x4x256xf32>
    %5 = vector.broadcast %1 : vector<1x4x1xf32> to vector<1x4x256xf32>
    %6 = arith.mulf %4, %5 : vector<1x4x256xf32>
    %7 = vector.broadcast %3 : vector<1x4x1xf32> to vector<1x4x256xf32>
    %8 = arith.addf %6, %7 : vector<1x4x256xf32>
    %c0_6 = arith.constant 0 : index
    %c0_7 = arith.constant 0 : index
    %c0_8 = arith.constant 0 : index
    %9 = vector.load %arg4[%c0_6, %c0_7, %c0_8] : memref<1x4x256xf32, #tpu.memory_space<vmem>>, vector<1x4x256xf32>
    tpu.vector_store %arg4[%c0_6, %c0_7, %c0_8], %8 {strides = array<i32>} : memref<1x4x256xf32, #tpu.memory_space<vmem>>, vector<1x4x256xf32>,
    return
  }
  func.func @transform_0(%arg0: i32) -> (i32, i32, i32) {
    %c0_i32 = arith.constant 0 : i32
    %c0_i32_0 = arith.constant 0 : i32
    %c0_i32_1 = arith.constant 0 : i32
    return %arg0, %c0_i32, %c0_i32_0 : i32, i32, i32
  }
  func.func @transform_1(%arg0: i32) -> (i32, i32) {
    %c0_i32 = arith.constant 0 : i32
    %c0_i32_0 = arith.constant 0 : i32
    %c0_i32_1 = arith.constant 0 : i32
    return %c0_i32, %c0_i32_0 : i32, i32
  }
  func.func @transform_2(%arg0: i32) -> (i32, i32) {
    %c0_i32 = arith.constant 0 : i32
    %c0_i32_0 = arith.constant 0 : i32
    %c0_i32_1 = arith.constant 0 : i32
    return %c0_i32, %c0_i32_0 : i32, i32
  }
  func.func @transform_3(%arg0: i32) -> (i32, i32, i32) {
    %c0_i32 = arith.constant 0 : i32
    %c0_i32_0 = arith.constant 0 : i32
    %c0_i32_1 = arith.constant 0 : i32
    return %arg0, %c0_i32, %c0_i32_0 : i32, i32, i32
  }
}

module attributes {stable_mosaic.version = 11 : i64} {
  func.func @_conv_stats_kernel(%arg0: i32, %arg1: memref<1x4x256xf32, #tpu.memory_space<vmem>>, %arg2: memref<9x4x4xf32, #tpu.memory_space<vmem>>, %arg3: memref<4x1xf32, #tpu.memory_space<vmem>>, %arg4: memref<9x256xf32, #tpu.memory_space<vmem>>, %arg5: memref<1x4x256xf32, #tpu.memory_space<vmem>>, %arg6: memref<1x1x4xf32, #tpu.memory_space<vmem>>, %arg7: memref<1x1x4xf32, #tpu.memory_space<vmem>>) attributes {dimension_semantics = [#tpu.dimension_semantics<parallel>], iteration_bounds = array<i64: 2>, scalar_prefetch = 0 : i64, scratch_operands = 0 : i64, tpu.core_type = #tpu.core_type<tc>, window_params = [{transform_indices = @transform_0, window_bounds = array<i64: 1, 4, 256>}, {pipeline_mode = #tpu.pipeline_mode<synchronous>, transform_indices = @transform_1, window_bounds = array<i64: 9, 4, 4>}, {pipeline_mode = #tpu.pipeline_mode<synchronous>, transform_indices = @transform_2, window_bounds = array<i64: 4, 1>}, {pipeline_mode = #tpu.pipeline_mode<synchronous>, transform_indices = @transform_3, window_bounds = array<i64: 9, 256>}, {transform_indices = @transform_4, window_bounds = array<i64: 1, 4, 256>}, {transform_indices = @transform_5, window_bounds = array<i64: 1, 1, 4>}, {transform_indices = @transform_6, window_bounds = array<i64: 1, 1, 4>}]} {
    %c0 = arith.constant 0 : index
    %c0_0 = arith.constant 0 : index
    %c0_1 = arith.constant 0 : index
    %0 = vector.load %arg1[%c0, %c0_0, %c0_1] : memref<1x4x256xf32, #tpu.memory_space<vmem>>, vector<1x4x256xf32>
    %cst = arith.constant 0.000000e+00 : f32
    %1 = vector.broadcast %cst : f32 to vector<1x4x256xf32>
    %c17_i32 = arith.constant 17 : i32
    %2 = tpu.dynamic_rotate %0 by %c17_i32 dim 2 : vector<1x4x256xf32>, i32 -> vector<1x4x256xf32>
    %c0_2 = arith.constant 0 : index
    %c0_3 = arith.constant 0 : index
    %3 = vector.load %arg4[%c0_2, %c0_3] : memref<9x256xf32, #tpu.memory_space<vmem>>, vector<1x256xf32>
    %4 = vector.shape_cast %3 : vector<1x256xf32> to vector<256xf32>
    %5 = vector.shape_cast %4 : vector<256xf32> to vector<1x1x256xf32>
    %6 = vector.broadcast %5 : vector<1x1x256xf32> to vector<1x4x256xf32>
    %7 = arith.mulf %2, %6 : vector<1x4x256xf32>
    %c0_4 = arith.constant 0 : index
    %c0_5 = arith.constant 0 : index
    %c0_6 = arith.constant 0 : index
    %8 = vector.load %arg2[%c0_4, %c0_5, %c0_6] : memref<9x4x4xf32, #tpu.memory_space<vmem>>, vector<1x4x4xf32>
    %9 = vector.shape_cast %8 : vector<1x4x4xf32> to vector<4x4xf32>
    %10 = vector.shape_cast %9 : vector<4x4xf32> to vector<1x4x4xf32>
    %cst_7 = arith.constant dense<0.000000e+00> : vector<1x4x256xf32>
    %11 = tpu.matmul %10, %7, %cst_7 {dimension_numbers = #tpu.dot_dimension_numbers<[2], [1], [1], [2], [0, 0, 0, 1, 1, 2], [0], [0]>} : vector<1x4x4xf32>, vector<1x4x256xf32>, vector<1x4x256xf32> -> vector<1x4x256xf32>
    %12 = arith.addf %1, %11 : vector<1x4x256xf32>
    %c16_i32 = arith.constant 16 : i32
    %13 = tpu.dynamic_rotate %0 by %c16_i32 dim 2 : vector<1x4x256xf32>, i32 -> vector<1x4x256xf32>
    %c1 = arith.constant 1 : index
    %c0_8 = arith.constant 0 : index
    %14 = vector.load %arg4[%c1, %c0_8] : memref<9x256xf32, #tpu.memory_space<vmem>>, vector<1x256xf32>
    %15 = vector.shape_cast %14 : vector<1x256xf32> to vector<256xf32>
    %16 = vector.shape_cast %15 : vector<256xf32> to vector<1x1x256xf32>
    %17 = vector.broadcast %16 : vector<1x1x256xf32> to vector<1x4x256xf32>
    %18 = arith.mulf %13, %17 : vector<1x4x256xf32>
    %c1_9 = arith.constant 1 : index
    %c0_10 = arith.constant 0 : index
    %c0_11 = arith.constant 0 : index
    %19 = vector.load %arg2[%c1_9, %c0_10, %c0_11] : memref<9x4x4xf32, #tpu.memory_space<vmem>>, vector<1x4x4xf32>
    %20 = vector.shape_cast %19 : vector<1x4x4xf32> to vector<4x4xf32>
    %21 = vector.shape_cast %20 : vector<4x4xf32> to vector<1x4x4xf32>
    %cst_12 = arith.constant dense<0.000000e+00> : vector<1x4x256xf32>
    %22 = tpu.matmul %21, %18, %cst_12 {dimension_numbers = #tpu.dot_dimension_numbers<[2], [1], [1], [2], [0, 0, 0, 1, 1, 2], [0], [0]>} : vector<1x4x4xf32>, vector<1x4x256xf32>, vector<1x4x256xf32> -> vector<1x4x256xf32>
    %23 = arith.addf %12, %22 : vector<1x4x256xf32>
    %c15_i32 = arith.constant 15 : i32
    %24 = tpu.dynamic_rotate %0 by %c15_i32 dim 2 : vector<1x4x256xf32>, i32 -> vector<1x4x256xf32>
    %c2 = arith.constant 2 : index
    %c0_13 = arith.constant 0 : index
    %25 = vector.load %arg4[%c2, %c0_13] : memref<9x256xf32, #tpu.memory_space<vmem>>, vector<1x256xf32>
    %26 = vector.shape_cast %25 : vector<1x256xf32> to vector<256xf32>
    %27 = vector.shape_cast %26 : vector<256xf32> to vector<1x1x256xf32>
    %28 = vector.broadcast %27 : vector<1x1x256xf32> to vector<1x4x256xf32>
    %29 = arith.mulf %24, %28 : vector<1x4x256xf32>
    %c2_14 = arith.constant 2 : index
    %c0_15 = arith.constant 0 : index
    %c0_16 = arith.constant 0 : index
    %30 = vector.load %arg2[%c2_14, %c0_15, %c0_16] : memref<9x4x4xf32, #tpu.memory_space<vmem>>, vector<1x4x4xf32>
    %31 = vector.shape_cast %30 : vector<1x4x4xf32> to vector<4x4xf32>
    %32 = vector.shape_cast %31 : vector<4x4xf32> to vector<1x4x4xf32>
    %cst_17 = arith.constant dense<0.000000e+00> : vector<1x4x256xf32>
    %33 = tpu.matmul %32, %29, %cst_17 {dimension_numbers = #tpu.dot_dimension_numbers<[2], [1], [1], [2], [0, 0, 0, 1, 1, 2], [0], [0]>} : vector<1x4x4xf32>, vector<1x4x256xf32>, vector<1x4x256xf32> -> vector<1x4x256xf32>
    %34 = arith.addf %23, %33 : vector<1x4x256xf32>
    %c1_i32 = arith.constant 1 : i32
    %35 = tpu.dynamic_rotate %0 by %c1_i32 dim 2 : vector<1x4x256xf32>, i32 -> vector<1x4x256xf32>
    %c3 = arith.constant 3 : index
    %c0_18 = arith.constant 0 : index
    %36 = vector.load %arg4[%c3, %c0_18] : memref<9x256xf32, #tpu.memory_space<vmem>>, vector<1x256xf32>
    %37 = vector.shape_cast %36 : vector<1x256xf32> to vector<256xf32>
    %38 = vector.shape_cast %37 : vector<256xf32> to vector<1x1x256xf32>
    %39 = vector.broadcast %38 : vector<1x1x256xf32> to vector<1x4x256xf32>
    %40 = arith.mulf %35, %39 : vector<1x4x256xf32>
    %c3_19 = arith.constant 3 : index
    %c0_20 = arith.constant 0 : index
    %c0_21 = arith.constant 0 : index
    %41 = vector.load %arg2[%c3_19, %c0_20, %c0_21] : memref<9x4x4xf32, #tpu.memory_space<vmem>>, vector<1x4x4xf32>
    %42 = vector.shape_cast %41 : vector<1x4x4xf32> to vector<4x4xf32>
    %43 = vector.shape_cast %42 : vector<4x4xf32> to vector<1x4x4xf32>
    %cst_22 = arith.constant dense<0.000000e+00> : vector<1x4x256xf32>
    %44 = tpu.matmul %43, %40, %cst_22 {dimension_numbers = #tpu.dot_dimension_numbers<[2], [1], [1], [2], [0, 0, 0, 1, 1, 2], [0], [0]>} : vector<1x4x4xf32>, vector<1x4x256xf32>, vector<1x4x256xf32> -> vector<1x4x256xf32>
    %45 = arith.addf %34, %44 : vector<1x4x256xf32>
    %c4 = arith.constant 4 : index
    %c0_23 = arith.constant 0 : index
    %c0_24 = arith.constant 0 : index
    %46 = vector.load %arg2[%c4, %c0_23, %c0_24] : memref<9x4x4xf32, #tpu.memory_space<vmem>>, vector<1x4x4xf32>
    %47 = vector.shape_cast %46 : vector<1x4x4xf32> to vector<4x4xf32>
    %48 = vector.shape_cast %47 : vector<4x4xf32> to vector<1x4x4xf32>
    %cst_25 = arith.constant dense<0.000000e+00> : vector<1x4x256xf32>
    %49 = tpu.matmul %48, %0, %cst_25 {dimension_numbers = #tpu.dot_dimension_numbers<[2], [1], [1], [2], [0, 0, 0, 1, 1, 2], [0], [0]>} : vector<1x4x4xf32>, vector<1x4x256xf32>, vector<1x4x256xf32> -> vector<1x4x256xf32>
    %50 = arith.addf %45, %49 : vector<1x4x256xf32>
    %c255_i32 = arith.constant 255 : i32
    %51 = tpu.dynamic_rotate %0 by %c255_i32 dim 2 : vector<1x4x256xf32>, i32 -> vector<1x4x256xf32>
    %c5 = arith.constant 5 : index
    %c0_26 = arith.constant 0 : index
    %52 = vector.load %arg4[%c5, %c0_26] : memref<9x256xf32, #tpu.memory_space<vmem>>, vector<1x256xf32>
    %53 = vector.shape_cast %52 : vector<1x256xf32> to vector<256xf32>
    %54 = vector.shape_cast %53 : vector<256xf32> to vector<1x1x256xf32>
    %55 = vector.broadcast %54 : vector<1x1x256xf32> to vector<1x4x256xf32>
    %56 = arith.mulf %51, %55 : vector<1x4x256xf32>
    %c5_27 = arith.constant 5 : index
    %c0_28 = arith.constant 0 : index
    %c0_29 = arith.constant 0 : index
    %57 = vector.load %arg2[%c5_27, %c0_28, %c0_29] : memref<9x4x4xf32, #tpu.memory_space<vmem>>, vector<1x4x4xf32>
    %58 = vector.shape_cast %57 : vector<1x4x4xf32> to vector<4x4xf32>
    %59 = vector.shape_cast %58 : vector<4x4xf32> to vector<1x4x4xf32>
    %cst_30 = arith.constant dense<0.000000e+00> : vector<1x4x256xf32>
    %60 = tpu.matmul %59, %56, %cst_30 {dimension_numbers = #tpu.dot_dimension_numbers<[2], [1], [1], [2], [0, 0, 0, 1, 1, 2], [0], [0]>} : vector<1x4x4xf32>, vector<1x4x256xf32>, vector<1x4x256xf32> -> vector<1x4x256xf32>
    %61 = arith.addf %50, %60 : vector<1x4x256xf32>
    %c241_i32 = arith.constant 241 : i32
    %62 = tpu.dynamic_rotate %0 by %c241_i32 dim 2 : vector<1x4x256xf32>, i32 -> vector<1x4x256xf32>
    %c6 = arith.constant 6 : index
    %c0_31 = arith.constant 0 : index
    %63 = vector.load %arg4[%c6, %c0_31] : memref<9x256xf32, #tpu.memory_space<vmem>>, vector<1x256xf32>
    %64 = vector.shape_cast %63 : vector<1x256xf32> to vector<256xf32>
    %65 = vector.shape_cast %64 : vector<256xf32> to vector<1x1x256xf32>
    %66 = vector.broadcast %65 : vector<1x1x256xf32> to vector<1x4x256xf32>
    %67 = arith.mulf %62, %66 : vector<1x4x256xf32>
    %c6_32 = arith.constant 6 : index
    %c0_33 = arith.constant 0 : index
    %c0_34 = arith.constant 0 : index
    %68 = vector.load %arg2[%c6_32, %c0_33, %c0_34] : memref<9x4x4xf32, #tpu.memory_space<vmem>>, vector<1x4x4xf32>
    %69 = vector.shape_cast %68 : vector<1x4x4xf32> to vector<4x4xf32>
    %70 = vector.shape_cast %69 : vector<4x4xf32> to vector<1x4x4xf32>
    %cst_35 = arith.constant dense<0.000000e+00> : vector<1x4x256xf32>
    %71 = tpu.matmul %70, %67, %cst_35 {dimension_numbers = #tpu.dot_dimension_numbers<[2], [1], [1], [2], [0, 0, 0, 1, 1, 2], [0], [0]>} : vector<1x4x4xf32>, vector<1x4x256xf32>, vector<1x4x256xf32> -> vector<1x4x256xf32>
    %72 = arith.addf %61, %71 : vector<1x4x256xf32>
    %c240_i32 = arith.constant 240 : i32
    %73 = tpu.dynamic_rotate %0 by %c240_i32 dim 2 : vector<1x4x256xf32>, i32 -> vector<1x4x256xf32>
    %c7 = arith.constant 7 : index
    %c0_36 = arith.constant 0 : index
    %74 = vector.load %arg4[%c7, %c0_36] : memref<9x256xf32, #tpu.memory_space<vmem>>, vector<1x256xf32>
    %75 = vector.shape_cast %74 : vector<1x256xf32> to vector<256xf32>
    %76 = vector.shape_cast %75 : vector<256xf32> to vector<1x1x256xf32>
    %77 = vector.broadcast %76 : vector<1x1x256xf32> to vector<1x4x256xf32>
    %78 = arith.mulf %73, %77 : vector<1x4x256xf32>
    %c7_37 = arith.constant 7 : index
    %c0_38 = arith.constant 0 : index
    %c0_39 = arith.constant 0 : index
    %79 = vector.load %arg2[%c7_37, %c0_38, %c0_39] : memref<9x4x4xf32, #tpu.memory_space<vmem>>, vector<1x4x4xf32>
    %80 = vector.shape_cast %79 : vector<1x4x4xf32> to vector<4x4xf32>
    %81 = vector.shape_cast %80 : vector<4x4xf32> to vector<1x4x4xf32>
    %cst_40 = arith.constant dense<0.000000e+00> : vector<1x4x256xf32>
    %82 = tpu.matmul %81, %78, %cst_40 {dimension_numbers = #tpu.dot_dimension_numbers<[2], [1], [1], [2], [0, 0, 0, 1, 1, 2], [0], [0]>} : vector<1x4x4xf32>, vector<1x4x256xf32>, vector<1x4x256xf32> -> vector<1x4x256xf32>
    %83 = arith.addf %72, %82 : vector<1x4x256xf32>
    %c239_i32 = arith.constant 239 : i32
    %84 = tpu.dynamic_rotate %0 by %c239_i32 dim 2 : vector<1x4x256xf32>, i32 -> vector<1x4x256xf32>
    %c8 = arith.constant 8 : index
    %c0_41 = arith.constant 0 : index
    %85 = vector.load %arg4[%c8, %c0_41] : memref<9x256xf32, #tpu.memory_space<vmem>>, vector<1x256xf32>
    %86 = vector.shape_cast %85 : vector<1x256xf32> to vector<256xf32>
    %87 = vector.shape_cast %86 : vector<256xf32> to vector<1x1x256xf32>
    %88 = vector.broadcast %87 : vector<1x1x256xf32> to vector<1x4x256xf32>
    %89 = arith.mulf %84, %88 : vector<1x4x256xf32>
    %c8_42 = arith.constant 8 : index
    %c0_43 = arith.constant 0 : index
    %c0_44 = arith.constant 0 : index
    %90 = vector.load %arg2[%c8_42, %c0_43, %c0_44] : memref<9x4x4xf32, #tpu.memory_space<vmem>>, vector<1x4x4xf32>
    %91 = vector.shape_cast %90 : vector<1x4x4xf32> to vector<4x4xf32>
    %92 = vector.shape_cast %91 : vector<4x4xf32> to vector<1x4x4xf32>
    %cst_45 = arith.constant dense<0.000000e+00> : vector<1x4x256xf32>
    %93 = tpu.matmul %92, %89, %cst_45 {dimension_numbers = #tpu.dot_dimension_numbers<[2], [1], [1], [2], [0, 0, 0, 1, 1, 2], [0], [0]>} : vector<1x4x4xf32>, vector<1x4x256xf32>, vector<1x4x256xf32> -> vector<1x4x256xf32>
    %94 = arith.addf %83, %93 : vector<1x4x256xf32>
    %c0_46 = arith.constant 0 : index
    %c0_47 = arith.constant 0 : index
    %95 = vector.load %arg3[%c0_46, %c0_47] : memref<4x1xf32, #tpu.memory_space<vmem>>, vector<4x1xf32>
    %96 = vector.shape_cast %95 : vector<4x1xf32> to vector<1x4x1xf32>
    %97 = vector.broadcast %96 : vector<1x4x1xf32> to vector<1x4x256xf32>
    %98 = arith.addf %94, %97 : vector<1x4x256xf32>
    %cst_48 = arith.constant 0.000000e+00 : f32
    %99 = vector.broadcast %cst_48 : f32 to vector<1x4x256xf32>
    %100 = arith.cmpf ogt, %98, %99 : vector<1x4x256xf32>
    %cst_49 = arith.constant 0.00999999977 : f32
    %101 = vector.broadcast %cst_49 : f32 to vector<1x4x256xf32>
    %102 = arith.mulf %101, %98 : vector<1x4x256xf32>
    %103 = arith.select %100, %98, %102 : vector<1x4x256xi1>, vector<1x4x256xf32>
    %c0_50 = arith.constant 0 : index
    %c0_51 = arith.constant 0 : index
    %c0_52 = arith.constant 0 : index
    %104 = vector.load %arg5[%c0_50, %c0_51, %c0_52] : memref<1x4x256xf32, #tpu.memory_space<vmem>>, vector<1x4x256xf32>
    tpu.vector_store %arg5[%c0_50, %c0_51, %c0_52], %103 {strides = array<i32>} : memref<1x4x256xf32, #tpu.memory_space<vmem>>, vector<1x4x256xf32>,
    %cst_53 = arith.constant dense<0.000000e+00> : vector<4xf32>
    %105 = vector.multi_reduction <add>, %103, %cst_53 [0, 2] : vector<1x4x256xf32> to vector<4xf32>
    %cst_54 = arith.constant 3.906250e-03 : f32
    %106 = vector.broadcast %cst_54 : f32 to vector<4xf32>
    %107 = arith.mulf %105, %106 : vector<4xf32>
    %108 = vector.shape_cast %107 : vector<4xf32> to vector<1x4x1xf32>
    %109 = vector.broadcast %108 : vector<1x4x1xf32> to vector<1x4x256xf32>
    %110 = arith.subf %103, %109 : vector<1x4x256xf32>
    %111 = arith.mulf %110, %110 : vector<1x4x256xf32>
    %cst_55 = arith.constant dense<0.000000e+00> : vector<4xf32>
    %112 = vector.multi_reduction <add>, %111, %cst_55 [0, 2] : vector<1x4x256xf32> to vector<4xf32>
    %113 = vector.shape_cast %105 : vector<4xf32> to vector<1x1x4xf32>
    %c0_56 = arith.constant 0 : index
    %c0_57 = arith.constant 0 : index
    %c0_58 = arith.constant 0 : index
    %114 = vector.load %arg6[%c0_56, %c0_57, %c0_58] : memref<1x1x4xf32, #tpu.memory_space<vmem>>, vector<1x1x4xf32>
    tpu.vector_store %arg6[%c0_56, %c0_57, %c0_58], %113 {strides = array<i32>} : memref<1x1x4xf32, #tpu.memory_space<vmem>>, vector<1x1x4xf32>,
    %115 = vector.shape_cast %112 : vector<4xf32> to vector<1x1x4xf32>
    %c0_59 = arith.constant 0 : index
    %c0_60 = arith.constant 0 : index
    %c0_61 = arith.constant 0 : index
    %116 = vector.load %arg7[%c0_59, %c0_60, %c0_61] : memref<1x1x4xf32, #tpu.memory_space<vmem>>, vector<1x1x4xf32>
    tpu.vector_store %arg7[%c0_59, %c0_60, %c0_61], %115 {strides = array<i32>} : memref<1x1x4xf32, #tpu.memory_space<vmem>>, vector<1x1x4xf32>,
    return
  }
  func.func @transform_0(%arg0: i32) -> (i32, i32, i32) {
    %c0_i32 = arith.constant 0 : i32
    %c0_i32_0 = arith.constant 0 : i32
    %c0_i32_1 = arith.constant 0 : i32
    return %arg0, %c0_i32, %c0_i32_0 : i32, i32, i32
  }
  func.func @transform_1(%arg0: i32) -> (i32, i32, i32) {
    %c0_i32 = arith.constant 0 : i32
    %c0_i32_0 = arith.constant 0 : i32
    %c0_i32_1 = arith.constant 0 : i32
    %c0_i32_2 = arith.constant 0 : i32
    return %c0_i32, %c0_i32_0, %c0_i32_1 : i32, i32, i32
  }
  func.func @transform_2(%arg0: i32) -> (i32, i32) {
    %c0_i32 = arith.constant 0 : i32
    %c0_i32_0 = arith.constant 0 : i32
    %c0_i32_1 = arith.constant 0 : i32
    return %c0_i32, %c0_i32_0 : i32, i32
  }
  func.func @transform_3(%arg0: i32) -> (i32, i32) {
    %c0_i32 = arith.constant 0 : i32
    %c0_i32_0 = arith.constant 0 : i32
    %c0_i32_1 = arith.constant 0 : i32
    return %c0_i32, %c0_i32_0 : i32, i32
  }
  func.func @transform_4(%arg0: i32) -> (i32, i32, i32) {
    %c0_i32 = arith.constant 0 : i32
    %c0_i32_0 = arith.constant 0 : i32
    %c0_i32_1 = arith.constant 0 : i32
    return %arg0, %c0_i32, %c0_i32_0 : i32, i32, i32
  }
  func.func @transform_5(%arg0: i32) -> (i32, i32, i32) {
    %c0_i32 = arith.constant 0 : i32
    %c0_i32_0 = arith.constant 0 : i32
    %c0_i32_1 = arith.constant 0 : i32
    return %arg0, %c0_i32, %c0_i32_0 : i32, i32, i32
  }
  func.func @transform_6(%arg0: i32) -> (i32, i32, i32) {
    %c0_i32 = arith.constant 0 : i32
    %c0_i32_0 = arith.constant 0 : i32
    %c0_i32_1 = arith.constant 0 : i32
    return %arg0, %c0_i32, %c0_i32_0 : i32, i32, i32
  }
}

</mosaic_0001>

<llo_original>
// kernel: conv_bridge_block.3
$region0: #{conv_bridge_block.3}
  #allocation0 [shape = 'u32[]', space=smem, size = 0x4, offset = 0x4, fixed_abs, tag = 'smem constant byte address 0x4 - core index']
  #allocation1 [shape = 'u32[144,128]{1,0:T(1,128)}', space=vmem, size = 0x12000, scoped, tag = 'internal scratch']
  %s0 = inlined_call_operand.vmem [shape: f32[2,4,256], index: 0, kind: input, shape index: {}, may-alias: {0,3}]
  %s1 = inlined_call_operand.vmem [shape: f32[4,1], index: 1, kind: input, shape index: {}]
  %s2 = inlined_call_operand.vmem [shape: f32[4,1], index: 2, kind: input, shape index: {}]
  %s3 = inlined_call_operand.vmem [shape: f32[2,4,256], index: 3, kind: output, shape index: {}, may-alias: {0,3}]
  %s4 = sld [smem:[#allocation0]]
  $region45: #{conv_bridge_block.3} parent=0
    _
  %s6 = ssub.s32 1, %s4
  %s7 = scalar_select 0, %s6, %s4
  loop: start=0, step=1, limit=4
  $region2: #{conv_bridge_block.3} parent=0 // loop_pre_header
    _
  $region3: #{conv_bridge_block.3} parent=0 // loop_header
    %s9 = sphi 0, %s13
    %p10 = scmp.ge.s32.totalorder %s9, 4
    %s19 = sphi 0, %s21
    %s22 = sphi 0, %s19
    %s23 = sphi 0, %s22
    %s39 = sphi 0, %s23
    %s43 = sphi 0, %s43
    %s45 = sphi 0, %s43
    %s46 = sphi 0, %s45
    %s60 = sphi 0, %s46
    %s64 = sphi 0, %s64
    %s66 = sphi 0, %s64
    %s67 = sphi 0, %s66
    %s81 = sphi 0, %s67
    %s87 = sphi 0, %s89
    %s90 = sphi 0, %s87
    %s91 = sphi 0, %s90
    %s107 = sphi 0, %s91
  $region4: #{conv_bridge_block.3} parent=0 // loop_header_branch
    %12 = sbr.rel (%p10) target = $region8
  $region5: #{conv_bridge_block.3} parent=0 // loop_body
    %s14 = ssub.s32 %s9, 1
    %s15 = ssub.s32 %s9, 2
    %s16 = sadd.s32 %s9, 1
    %s17 = ssub.s32 %s9, %s16
    %p18 = scmp.eq.s32.totalorder %s17, 0
    %s20 = sadd.s32 %s19, 1
    %s21 = scalar_select %p18, %s19, %s20
    %p24 = pneg %p18
    %p25 = scmp.eq.s32.totalorder %s9, 1
    %p26 = por %p24, %p25
    %p27 = scmp.ne.s32.totalorder %s19, %s22
    %p28 = scmp.eq.s32.totalorder %s9, 0
    %p29 = por %p27, %p28
    %p30 = scmp.ne.s32.totalorder %s19, %s22
    %p31 = scmp.eq.s32.totalorder %s14, 1
    %p32 = por %p30, %p31
    %p33 = scmp.ne.s32.totalorder %s22, %s23
    %p34 = scmp.eq.s32.totalorder %s14, 0
    %p35 = por %p33, %p34
    %p36 = scmp.ne.s32.totalorder %s22, %s23
    %p37 = scmp.eq.s32.totalorder %s15, 1
    %p38 = por %p36, %p37
    %p40 = scmp.ne.s32.totalorder %s23, %s39
    %p41 = scmp.eq.s32.totalorder %s15, 0
    %p42 = por %p40, %p41
    %s44 = sadd.s32 %s43, 1
    %p47 = scmp.eq.s32.totalorder %s9, 1
    %p48 = scmp.ne.s32.totalorder %s43, %s45
    %p49 = scmp.eq.s32.totalorder %s9, 0
    %p50 = por %p48, %p49
    %p51 = scmp.ne.s32.totalorder %s43, %s45
    %p52 = scmp.eq.s32.totalorder %s14, 1
    %p53 = por %p51, %p52
    %p54 = scmp.ne.s32.totalorder %s45, %s46
    %p55 = scmp.eq.s32.totalorder %s14, 0
    %p56 = por %p54, %p55
    %p57 = scmp.ne.s32.totalorder %s45, %s46
    %p58 = scmp.eq.s32.totalorder %s15, 1
    %p59 = por %p57, %p58
    %p61 = scmp.ne.s32.totalorder %s46, %s60
    %p62 = scmp.eq.s32.totalorder %s15, 0
    %p63 = por %p61, %p62
    %s65 = sadd.s32 %s64, 1
    %p68 = scmp.eq.s32.totalorder %s9, 1
    %p69 = scmp.ne.s32.totalorder %s64, %s66
    %p70 = scmp.eq.s32.totalorder %s9, 0
    %p71 = por %p69, %p70
    %p72 = scmp.ne.s32.totalorder %s64, %s66
    %p73 = scmp.eq.s32.totalorder %s14, 1
    %p74 = por %p72, %p73
    %p75 = scmp.ne.s32.totalorder %s66, %s67
    %p76 = scmp.eq.s32.totalorder %s14, 0
    %p77 = por %p75, %p76
    %p78 = scmp.ne.s32.totalorder %s66, %s67
    %p79 = scmp.eq.s32.totalorder %s15, 1
    %p80 = por %p78, %p79
    %p82 = scmp.ne.s32.totalorder %s67, %s81
    %p83 = scmp.eq.s32.totalorder %s15, 0
    %p84 = por %p82, %p83
    %s85 = ssub.s32 %s9, %s16
    %p86 = scmp.eq.s32.totalorder %s85, 0
    %s88 = sadd.s32 %s87, 1
    %s89 = scalar_select %p86, %s87, %s88
    %p92 = pneg %p86
    %p93 = scmp.eq.s32.totalorder %s9, 1
    %p94 = por %p92, %p93
    %p95 = scmp.ne.s32.totalorder %s87, %s90
    %p96 = scmp.eq.s32.totalorder %s9, 0
    %p97 = por %p95, %p96
    %p98 = scmp.ne.s32.totalorder %s87, %s90
    %p99 = scmp.eq.s32.totalorder %s14, 1
    %p100 = por %p98, %p99
    %p101 = scmp.ne.s32.totalorder %s90, %s91
    %p102 = scmp.eq.s32.totalorder %s14, 0
    %p103 = por %p101, %p102
    %p104 = scmp.ne.s32.totalorder %s90, %s91
    %p105 = scmp.eq.s32.totalorder %s15, 1
    %p106 = por %p104, %p105
    %p108 = scmp.ne.s32.totalorder %s91, %s107
    %p109 = scmp.eq.s32.totalorder %s15, 0
    %p110 = por %p108, %p109
    %p111 = scmp.le.s32.totalorder 1, %s9
    %p112 = scmp.lt.s32.totalorder %s9, 3
    %p113 = pnand %p111, %p112
    %p114 = pneg %p113
    // Predicated region
    $region9: #{conv_bridge_block.3} parent=5 // pred_check
      _
    $region10: #{conv_bridge_block.3} parent=5 // pred_check_branch
      %116 = sbr.rel (%p113) target = $region12
    $region11: #{conv_bridge_block.3} parent=5 // pred_region
      %s117 = ssub.s32 %s9, 1
      // Predicated region
      $region13: #{conv_bridge_block.3} parent=11 // pred_check
        %p118 = pneg %p56
      $region14: #{conv_bridge_block.3} parent=11 // pred_check_branch
        %120 = sbr.rel (%p118) target = $region16
      $region15: #{conv_bridge_block.3} parent=11 // pred_region
        _
      $region16: #{conv_bridge_block.3} parent=11 // pred_fallthru
        _
      // Predicated region
      $region17: #{conv_bridge_block.3} parent=11 // pred_check
        %p121 = pneg %p77
      $region18: #{conv_bridge_block.3} parent=11 // pred_check_branch
        %123 = sbr.rel (%p121) target = $region20
      $region19: #{conv_bridge_block.3} parent=11 // pred_region
        _
      $region20: #{conv_bridge_block.3} parent=11 // pred_fallthru
        _
    $region12: #{conv_bridge_block.3} parent=5 // pred_fallthru
      _
    %p124 = scmp.lt.s32.totalorder %s9, 2
    // Predicated region
    $region21: #{conv_bridge_block.3} parent=5 // pred_check
      %p125 = pneg %p124
    $region22: #{conv_bridge_block.3} parent=5 // pred_check_branch
      %127 = sbr.rel (%p125) target = $region24
    $region23: #{conv_bridge_block.3} parent=5 // pred_region
      // Predicated region
      $region25: #{conv_bridge_block.3} parent=23 // pred_check
        %p128 = pneg %p29
      $region26: #{conv_bridge_block.3} parent=23 // pred_check_branch
        %130 = sbr.rel (%p128) target = $region28
      $region27: #{conv_bridge_block.3} parent=23 // pred_region
        %p131 = scmp.lt.s32.totalorder %s9, 1
        %s132 = scalar_select %p131, %s9, 1
        %s133 = smul.addr %s132, 2
        %s134 = smul.addr %s133, 4
        %s135 = scalar_lea.vmem %s0, %s134
      $region28: #{conv_bridge_block.3} parent=23 // pred_fallthru
        _
    $region24: #{conv_bridge_block.3} parent=5 // pred_fallthru
      _
    %p136 = scmp.le.s32.totalorder 1, %s9
    %p137 = scmp.lt.s32.totalorder %s9, 3
    %p138 = pnand %p136, %p137
    %p139 = pneg %p138
    // Predicated region
    $region29: #{conv_bridge_block.3} parent=5 // pred_check
      _
    $region30: #{conv_bridge_block.3} parent=5 // pred_check_branch
      %141 = sbr.rel (%p138) target = $region32
    $region31: #{conv_bridge_block.3} parent=5 // pred_region
      %s142 = ssub.s32 %s9, 1
      %p143 = scmp.lt.s32.totalorder %s14, 1
      %s144 = scalar_select %p143, %s14, 1
      %s145 = smul.addr %s144, 2
      %s146 = smul.addr %s145, 4
      %s147 = scalar_lea.vmem %s0, %s146
      %p148 = pneg %p35
      %p149 = pneg %p32
      %p150 = pneg %p56
      %p151 = pneg %p53
      %p152 = pneg %p77
      %p153 = pneg %p74
      %p154 = pneg %p103
      %p155 = pneg %p100
      %p156 = scmp.lt.s32.totalorder %s14, 1
      %s157 = scalar_select %p156, %s14, 1
      %s158 = smul.addr %s157, 2
      %s159 = smul.addr %s158, 4
      %s160 = scalar_lea.vmem %s3, %s159
      %p161 = scmp.lt.s32.totalorder %s14, 1
      %s162 = scalar_select %p161, %s14, 1
      %s163 = smul.addr %s162, 2
      %s164 = smul.addr %s163, 4
      %s165 = scalar_lea.vmem %s0, %s164
      %p166 = scmp.lt.s32.totalorder %s14, 1
      %s167 = scalar_select %p166, %s14, 1
      %s168 = smul.addr %s167, 2
      %s169 = smul.addr %s168, 4
      %s170 = scalar_lea.vmem %s3, %s169
      %v171 = vld [vmem:[%s1] sm:$0xf]
      %v172 = vld [vmem:[%s2] sm:$0xf]
      %v173 = vld [vmem:[%s165] sm:$0xff]
      %175 = vset.pattern.permute.xlu0 0
      %176 = vperm.xlu0 %175, %v171
      %v177 = vpop.permute.xlu0 %176
      %v179 = vunpack.c.l.s4 839922192
      %v180 = vunpack.c.0.s8 %v179
      %v181 = vlaneseq
      %v182 = vshrl.u32 %v181, 7
      %v183 = vsub.s32 %v180, %v182
      %v184 = vrot.slane %v177, %v183
      %v186 = vmul.f32 %v173, %v184
      %188 = vset.pattern.permute.xlu0 0
      %189 = vperm.xlu0 %188, %v172
      %v190 = vpop.permute.xlu0 %189
      %v192 = vunpack.c.l.s4 839922192
      %v193 = vunpack.c.0.s8 %v192
      %v194 = vlaneseq
      %v195 = vshrl.u32 %v194, 7
      %v196 = vsub.s32 %v193, %v195
      %v197 = vrot.slane %v190, %v196
      %v199 = vadd.f32 %v186, %v197
      %200 = vst [vmem:[%s170] sm:$0xff] %v199
      %p201 = scmp.lt.s32.totalorder %s14, 1
      %s202 = scalar_select %p201, %s14, 1
      %s203 = smul.addr %s202, 2
      %s204 = smul.addr %s203, 4
      %s205 = scalar_lea.vmem %s3, %s204
      // Predicated region
      $region33: #{conv_bridge_block.3} parent=31 // pred_check
        %p206 = pneg %p100
      $region34: #{conv_bridge_block.3} parent=31 // pred_check_branch
        %208 = sbr.rel (%p206) target = $region36
      $region35: #{conv_bridge_block.3} parent=31 // pred_region
        _
      $region36: #{conv_bridge_block.3} parent=31 // pred_fallthru
        _
    $region32: #{conv_bridge_block.3} parent=5 // pred_fallthru
      _
    %p209 = scmp.le.s32.totalorder 2, %s9
    // Predicated region
    $region37: #{conv_bridge_block.3} parent=5 // pred_check
      %p210 = pneg %p209
    $region38: #{conv_bridge_block.3} parent=5 // pred_check_branch
      %212 = sbr.rel (%p210) target = $region40
    $region39: #{conv_bridge_block.3} parent=5 // pred_region
      %s213 = ssub.s32 %s9, 2
      // Predicated region
      $region41: #{conv_bridge_block.3} parent=39 // pred_check
        %p214 = pneg %p106
      $region42: #{conv_bridge_block.3} parent=39 // pred_check_branch
        %216 = sbr.rel (%p214) target = $region44
      $region43: #{conv_bridge_block.3} parent=39 // pred_region
        %p217 = scmp.lt.s32.totalorder %s15, 1
        %s218 = scalar_select %p217, %s15, 1
        %s219 = smul.addr %s218, 2
        %s220 = smul.addr %s219, 4
        %s221 = scalar_lea.vmem %s3, %s220
      $region44: #{conv_bridge_block.3} parent=39 // pred_fallthru
        _
    $region40: #{conv_bridge_block.3} parent=5 // pred_fallthru
      _
  $region6: #{conv_bridge_block.3} parent=0 // loop_footer
    %s13 = sadd.s32 1, %s9
  $region7: #{conv_bridge_block.3} parent=0 // loop_footer_branch
    %8 = sbr.rel target = $region3
  $region8: #{conv_bridge_block.3} parent=0 // loop_exit
    _

// kernel: conv_bridge_block.2
$region0: #{conv_bridge_block.2}
  #allocation0 [shape = 'u32[]', space=smem, size = 0x4, offset = 0x4, fixed_abs, tag = 'smem constant byte address 0x4 - core index']
  #allocation1 [shape = 'u32[144,128]{1,0:T(1,128)}', space=vmem, size = 0x12000, scoped, tag = 'internal scratch']
  %s0 = inlined_call_operand.vmem [shape: f32[2,4,256], index: 0, kind: input, shape index: {}]
  %s1 = inlined_call_operand.vmem [shape: f32[9,4,4], index: 1, kind: input, shape index: {}]
  %s2 = inlined_call_operand.vmem [shape: f32[4,1], index: 2, kind: input, shape index: {}]
  %s3 = inlined_call_operand.vmem [shape: f32[9,256], index: 3, kind: input, shape index: {}]
  %s4 = inlined_call_operand.vmem [shape: f32[2,4,256], index: 4, kind: output, shape index: {0}]
  %s5 = inlined_call_operand.vmem [shape: f32[2,1,4], index: 5, kind: output, shape index: {1}]
  %s6 = inlined_call_operand.vmem [shape: f32[2,1,4], index: 6, kind: output, shape index: {2}]
  %7 = xla_tuple %s4, %s5, %s6
  %s8 = sld [smem:[#allocation0]]
  $region65: #{conv_bridge_block.2} parent=0
    _
  %s10 = ssub.s32 1, %s8
  %s11 = scalar_select 0, %s10, %s8
  loop: start=0, step=1, limit=4
  $region2: #{conv_bridge_block.2} parent=0 // loop_pre_header
    _
  $region3: #{conv_bridge_block.2} parent=0 // loop_header
    %s13 = sphi 0, %s17
    %p14 = scmp.ge.s32.totalorder %s13, 4
    %s23 = sphi 0, %s25
    %s26 = sphi 0, %s23
    %s27 = sphi 0, %s26
    %s43 = sphi 0, %s27
    %s47 = sphi 0, %s47
    %s49 = sphi 0, %s47
    %s50 = sphi 0, %s49
    %s64 = sphi 0, %s50
    %s68 = sphi 0, %s68
    %s70 = sphi 0, %s68
    %s71 = sphi 0, %s70
    %s85 = sphi 0, %s71
    %s89 = sphi 0, %s89
    %s91 = sphi 0, %s89
    %s92 = sphi 0, %s91
    %s106 = sphi 0, %s92
    %s112 = sphi 0, %s114
    %s115 = sphi 0, %s112
    %s116 = sphi 0, %s115
    %s132 = sphi 0, %s116
    %s138 = sphi 0, %s140
    %s141 = sphi 0, %s138
    %s142 = sphi 0, %s141
    %s158 = sphi 0, %s142
    %s164 = sphi 0, %s166
    %s167 = sphi 0, %s164
    %s168 = sphi 0, %s167
    %s184 = sphi 0, %s168
  $region4: #{conv_bridge_block.2} parent=0 // loop_header_branch
    %16 = sbr.rel (%p14) target = $region8
  $region5: #{conv_bridge_block.2} parent=0 // loop_body
    %s18 = ssub.s32 %s13, 1
    %s19 = ssub.s32 %s13, 2
    %s20 = sadd.s32 %s13, 1
    %s21 = ssub.s32 %s13, %s20
    %p22 = scmp.eq.s32.totalorder %s21, 0
    %s24 = sadd.s32 %s23, 1
    %s25 = scalar_select %p22, %s23, %s24
    %p28 = pneg %p22
    %p29 = scmp.eq.s32.totalorder %s13, 1
    %p30 = por %p28, %p29
    %p31 = scmp.ne.s32.totalorder %s23, %s26
    %p32 = scmp.eq.s32.totalorder %s13, 0
    %p33 = por %p31, %p32
    %p34 = scmp.ne.s32.totalorder %s23, %s26
    %p35 = scmp.eq.s32.totalorder %s18, 1
    %p36 = por %p34, %p35
    %p37 = scmp.ne.s32.totalorder %s26, %s27
    %p38 = scmp.eq.s32.totalorder %s18, 0
    %p39 = por %p37, %p38
    %p40 = scmp.ne.s32.totalorder %s26, %s27
    %p41 = scmp.eq.s32.totalorder %s19, 1
    %p42 = por %p40, %p41
    %p44 = scmp.ne.s32.totalorder %s27, %s43
    %p45 = scmp.eq.s32.totalorder %s19, 0
    %p46 = por %p44, %p45
    %s48 = sadd.s32 %s47, 1
    %p51 = scmp.eq.s32.totalorder %s13, 1
    %p52 = scmp.ne.s32.totalorder %s47, %s49
    %p53 = scmp.eq.s32.totalorder %s13, 0
    %p54 = por %p52, %p53
    %p55 = scmp.ne.s32.totalorder %s47, %s49
    %p56 = scmp.eq.s32.totalorder %s18, 1
    %p57 = por %p55, %p56
    %p58 = scmp.ne.s32.totalorder %s49, %s50
    %p59 = scmp.eq.s32.totalorder %s18, 0
    %p60 = por %p58, %p59
    %p61 = scmp.ne.s32.totalorder %s49, %s50
    %p62 = scmp.eq.s32.totalorder %s19, 1
    %p63 = por %p61, %p62
    %p65 = scmp.ne.s32.totalorder %s50, %s64
    %p66 = scmp.eq.s32.totalorder %s19, 0
    %p67 = por %p65, %p66
    %s69 = sadd.s32 %s68, 1
    %p72 = scmp.eq.s32.totalorder %s13, 1
    %p73 = scmp.ne.s32.totalorder %s68, %s70
    %p74 = scmp.eq.s32.totalorder %s13, 0
    %p75 = por %p73, %p74
    %p76 = scmp.ne.s32.totalorder %s68, %s70
    %p77 = scmp.eq.s32.totalorder %s18, 1
    %p78 = por %p76, %p77
    %p79 = scmp.ne.s32.totalorder %s70, %s71
    %p80 = scmp.eq.s32.totalorder %s18, 0
    %p81 = por %p79, %p80
    %p82 = scmp.ne.s32.totalorder %s70, %s71
    %p83 = scmp.eq.s32.totalorder %s19, 1
    %p84 = por %p82, %p83
    %p86 = scmp.ne.s32.totalorder %s71, %s85
    %p87 = scmp.eq.s32.totalorder %s19, 0
    %p88 = por %p86, %p87
    %s90 = sadd.s32 %s89, 1
    %p93 = scmp.eq.s32.totalorder %s13, 1
    %p94 = scmp.ne.s32.totalorder %s89, %s91
    %p95 = scmp.eq.s32.totalorder %s13, 0
    %p96 = por %p94, %p95
    %p97 = scmp.ne.s32.totalorder %s89, %s91
    %p98 = scmp.eq.s32.totalorder %s18, 1
    %p99 = por %p97, %p98
    %p100 = scmp.ne.s32.totalorder %s91, %s92
    %p101 = scmp.eq.s32.totalorder %s18, 0
    %p102 = por %p100, %p101
    %p103 = scmp.ne.s32.totalorder %s91, %s92
    %p104 = scmp.eq.s32.totalorder %s19, 1
    %p105 = por %p103, %p104
    %p107 = scmp.ne.s32.totalorder %s92, %s106
    %p108 = scmp.eq.s32.totalorder %s19, 0
    %p109 = por %p107, %p108
    %s110 = ssub.s32 %s13, %s20
    %p111 = scmp.eq.s32.totalorder %s110, 0
    %s113 = sadd.s32 %s112, 1
    %s114 = scalar_select %p111, %s112, %s113
    %p117 = pneg %p111
    %p118 = scmp.eq.s32.totalorder %s13, 1
    %p119 = por %p117, %p118
    %p120 = scmp.ne.s32.totalorder %s112, %s115
    %p121 = scmp.eq.s32.totalorder %s13, 0
    %p122 = por %p120, %p121
    %p123 = scmp.ne.s32.totalorder %s112, %s115
    %p124 = scmp.eq.s32.totalorder %s18, 1
    %p125 = por %p123, %p124
    %p126 = scmp.ne.s32.totalorder %s115, %s116
    %p127 = scmp.eq.s32.totalorder %s18, 0
    %p128 = por %p126, %p127
    %p129 = scmp.ne.s32.totalorder %s115, %s116
    %p130 = scmp.eq.s32.totalorder %s19, 1
    %p131 = por %p129, %p130
    %p133 = scmp.ne.s32.totalorder %s116, %s132
    %p134 = scmp.eq.s32.totalorder %s19, 0
    %p135 = por %p133, %p134
    %s136 = ssub.s32 %s13, %s20
    %p137 = scmp.eq.s32.totalorder %s136, 0
    %s139 = sadd.s32 %s138, 1
    %s140 = scalar_select %p137, %s138, %s139
    %p143 = pneg %p137
    %p144 = scmp.eq.s32.totalorder %s13, 1
    %p145 = por %p143, %p144
    %p146 = scmp.ne.s32.totalorder %s138, %s141
    %p147 = scmp.eq.s32.totalorder %s13, 0
    %p148 = por %p146, %p147
    %p149 = scmp.ne.s32.totalorder %s138, %s141
    %p150 = scmp.eq.s32.totalorder %s18, 1
    %p151 = por %p149, %p150
    %p152 = scmp.ne.s32.totalorder %s141, %s142
    %p153 = scmp.eq.s32.totalorder %s18, 0
    %p154 = por %p152, %p153
    %p155 = scmp.ne.s32.totalorder %s141, %s142
    %p156 = scmp.eq.s32.totalorder %s19, 1
    %p157 = por %p155, %p156
    %p159 = scmp.ne.s32.totalorder %s142, %s158
    %p160 = scmp.eq.s32.totalorder %s19, 0
    %p161 = por %p159, %p160
    %s162 = ssub.s32 %s13, %s20
    %p163 = scmp.eq.s32.totalorder %s162, 0
    %s165 = sadd.s32 %s164, 1
    %s166 = scalar_select %p163, %s164, %s165
    %p169 = pneg %p163
    %p170 = scmp.eq.s32.totalorder %s13, 1
    %p171 = por %p169, %p170
    %p172 = scmp.ne.s32.totalorder %s164, %s167
    %p173 = scmp.eq.s32.totalorder %s13, 0
    %p174 = por %p172, %p173
    %p175 = scmp.ne.s32.totalorder %s164, %s167
    %p176 = scmp.eq.s32.totalorder %s18, 1
    %p177 = por %p175, %p176
    %p178 = scmp.ne.s32.totalorder %s167, %s168
    %p179 = scmp.eq.s32.totalorder %s18, 0
    %p180 = por %p178, %p179
    %p181 = scmp.ne.s32.totalorder %s167, %s168
    %p182 = scmp.eq.s32.totalorder %s19, 1
    %p183 = por %p181, %p182
    %p185 = scmp.ne.s32.totalorder %s168, %s184
    %p186 = scmp.eq.s32.totalorder %s19, 0
    %p187 = por %p185, %p186
    %p188 = scmp.le.s32.totalorder 1, %s13
    %p189 = scmp.lt.s32.totalorder %s13, 3
    %p190 = pnand %p188, %p189
    %p191 = pneg %p190
    // Predicated region
    $region9: #{conv_bridge_block.2} parent=5 // pred_check
      _
    $region10: #{conv_bridge_block.2} parent=5 // pred_check_branch
      %193 = sbr.rel (%p190) target = $region12
    $region11: #{conv_bridge_block.2} parent=5 // pred_region
      %s194 = ssub.s32 %s13, 1
      // Predicated region
      $region13: #{conv_bridge_block.2} parent=11 // pred_check
        %p195 = pneg %p60
      $region14: #{conv_bridge_block.2} parent=11 // pred_check_branch
        %197 = sbr.rel (%p195) target = $region16
      $region15: #{conv_bridge_block.2} parent=11 // pred_region
        _
      $region16: #{conv_bridge_block.2} parent=11 // pred_fallthru
        _
      // Predicated region
      $region17: #{conv_bridge_block.2} parent=11 // pred_check
        %p198 = pneg %p81
      $region18: #{conv_bridge_block.2} parent=11 // pred_check_branch
        %200 = sbr.rel (%p198) target = $region20
      $region19: #{conv_bridge_block.2} parent=11 // pred_region
        _
      $region20: #{conv_bridge_block.2} parent=11 // pred_fallthru
        _
      // Predicated region
      $region21: #{conv_bridge_block.2} parent=11 // pred_check
        %p201 = pneg %p102
      $region22: #{conv_bridge_block.2} parent=11 // pred_check_branch
        %203 = sbr.rel (%p201) target = $region24
      $region23: #{conv_bridge_block.2} parent=11 // pred_region
        _
      $region24: #{conv_bridge_block.2} parent=11 // pred_fallthru
        _
    $region12: #{conv_bridge_block.2} parent=5 // pred_fallthru
      _
    %p204 = scmp.lt.s32.totalorder %s13, 2
    // Predicated region
    $region25: #{conv_bridge_block.2} parent=5 // pred_check
      %p205 = pneg %p204
    $region26: #{conv_bridge_block.2} parent=5 // pred_check_branch
      %207 = sbr.rel (%p205) target = $region28
    $region27: #{conv_bridge_block.2} parent=5 // pred_region
      // Predicated region
      $region29: #{conv_bridge_block.2} parent=27 // pred_check
        %p208 = pneg %p33
      $region30: #{conv_bridge_block.2} parent=27 // pred_check_branch
        %210 = sbr.rel (%p208) target = $region32
      $region31: #{conv_bridge_block.2} parent=27 // pred_region
        %p211 = scmp.lt.s32.totalorder %s13, 1
        %s212 = scalar_select %p211, %s13, 1
        %s213 = smul.addr %s212, 2
        %s214 = smul.addr %s213, 4
        %s215 = scalar_lea.vmem %s0, %s214
      $region32: #{conv_bridge_block.2} parent=27 // pred_fallthru
        _
    $region28: #{conv_bridge_block.2} parent=5 // pred_fallthru
      _
    %p216 = scmp.le.s32.totalorder 1, %s13
    %p217 = scmp.lt.s32.totalorder %s13, 3
    %p218 = pnand %p216, %p217
    %p219 = pneg %p218
    // Predicated region
    $region33: #{conv_bridge_block.2} parent=5 // pred_check
      _
    $region34: #{conv_bridge_block.2} parent=5 // pred_check_branch
      %221 = sbr.rel (%p218) target = $region36
    $region35: #{conv_bridge_block.2} parent=5 // pred_region
      %s222 = ssub.s32 %s13, 1
      %p223 = scmp.lt.s32.totalorder %s18, 1
      %s224 = scalar_select %p223, %s18, 1
      %s225 = smul.addr %s224, 2
      %s226 = smul.addr %s225, 4
      %s227 = scalar_lea.vmem %s0, %s226
      %p228 = pneg %p39
      %p229 = pneg %p36
      %p230 = pneg %p60
      %p231 = pneg %p57
      %p232 = pneg %p81
      %p233 = pneg %p78
      %p234 = pneg %p102
      %p235 = pneg %p99
      %p236 = pneg %p128
      %p237 = pneg %p125
      %p238 = scmp.lt.s32.totalorder %s18, 1
      %s239 = scalar_select %p238, %s18, 1
      %s240 = smul.addr %s239, 2
      %s241 = smul.addr %s240, 4
      %s242 = scalar_lea.vmem %s4, %s241
      %p243 = pneg %p154
      %p244 = pneg %p151
      %p245 = scmp.lt.s32.totalorder %s18, 1
      %s246 = scalar_select %p245, %s18, 1
      %s247 = scalar_lea.vmem %s5, %s246
      %p248 = pneg %p180
      %p249 = pneg %p177
      %p250 = scmp.lt.s32.totalorder %s18, 1
      %s251 = scalar_select %p250, %s18, 1
      %s252 = scalar_lea.vmem %s6, %s251
      %p253 = scmp.lt.s32.totalorder %s18, 1
      %s254 = scalar_select %p253, %s18, 1
      %s255 = smul.addr %s254, 2
      %s256 = smul.addr %s255, 4
      %s257 = scalar_lea.vmem %s0, %s256
      %p258 = scmp.lt.s32.totalorder %s18, 1
      %s259 = scalar_select %p258, %s18, 1
      %s260 = smul.addr %s259, 2
      %s261 = smul.addr %s260, 4
      %s262 = scalar_lea.vmem %s4, %s261
      %p263 = scmp.lt.s32.totalorder %s18, 1
      %s264 = scalar_select %p263, %s18, 1
      %s265 = scalar_lea.vmem %s5, %s264
      %p266 = scmp.lt.s32.totalorder %s18, 1
      %s267 = scalar_select %p266, %s18, 1
      %s268 = scalar_lea.vmem %s6, %s267
      %v269 = vld [vmem:[%s257] sm:$0xff]
      %v271 = vcombine.high %v269, %v269
      %273 = vrot.lane.b32.xlu0 %v269, 17
      %v274 = vpop.permute.xlu0 %273
      %275 = vrot.lane.b32.xlu0 %v271, 17
      %v276 = vpop.permute.xlu0 %275
      %v277 = vlaneseq
      %v278 = vand.u32 %v277, 127
      %vm279 = vcmp.lt.s32.totalorder %v278, 17
      %v280 = vsel %vm279, %v274, %v276
      %v281 = vsel %vm279, %v276, %v274
      %v282 = vld [vmem:[%s3] ss:$8 sm:$0x3]
      %v284 = vlaneseq
      %v285 = vshrl.u32 %v284, 7
      %v286 = vsub.s32 0, %v285
      %v287 = vrot.slane %v282, %v286
      %v288 = vlaneseq
      %v289 = vshrl.u32 %v288, 7
      %v290 = vsub.s32 1, %v289
      %v291 = vrot.slane %v282, %v290
      %v294 = vmul.f32 %v281, %v287
      %v295 = vmul.f32 %v280, %v291
      %v296 = vld [vmem:[%s1] sm:$0xf]
      %297 = vrot.lane.b32.xlu0 %v269, 16
      %v298 = vpop.permute.xlu0 %297
      %299 = vrot.lane.b32.xlu0 %v271, 16
      %v300 = vpop.permute.xlu0 %299
      %vm301 = vcmp.lt.s32.totalorder %v278, 16
      %v302 = vsel %vm301, %v298, %v300
      %v303 = vsel %vm301, %v300, %v298
      %s304 = scalar_lea.vmem %s3, 1
      %v305 = vld [vmem:[%s304] ss:$8 sm:$0x3]
      %v307 = vlaneseq
      %v308 = vshrl.u32 %v307, 7
      %v309 = vsub.s32 0, %v308
      %v310 = vrot.slane %v305, %v309
      %v311 = vlaneseq
      %v312 = vshrl.u32 %v311, 7
      %v313 = vsub.s32 1, %v312
      %v314 = vrot.slane %v305, %v313
      %v317 = vmul.f32 %v303, %v310
      %v318 = vmul.f32 %v302, %v314
      %s319 = scalar_lea.vmem %s1, 4
      %v320 = vld [vmem:[%s319] sm:$0xf]
      %vm321 = vcmask 31744
      %v323 = vsel %vm321, %v320, 0
      %vm325 = vcmask 1043456
      %v327 = vsel %vm325, %v317, 0
      %v330 = vsel %vm325, %v318, 0
      %332 = vmatprep.subr.mxu0 %v330
      %333 = vmatpush1.msra.mxu0 %v327
      %334 = vmatprep.subr.mxu0 0.0
      %335 = vmatpush1.msra.mxu0 0.0
      %336 = vmatprep.subr.mxu0 0.0
      %337 = vmatpush1.msra.mxu0 0.0
      %338 = vmatprep.subr.mxu0 0.0
      %339 = vmatpush1.msra.mxu0 0.0
      %340 = vmatprep.subr.mxu0 0.0
      %341 = vmatpush1.msra.mxu0 0.0
      %342 = vmatprep.subr.mxu0 0.0
      %343 = vmatpush1.msra.mxu0 0.0
      %344 = vmatprep.subr.mxu0 0.0
      %345 = vmatpush1.msra.mxu0 0.0
      %346 = vmatprep.subr.mxu0 0.0
      %347 = vmatpush1.msra.mxu0 0.0
      %348 = vmatprep.subr.mxu0 0.0
      %349 = vmatpush1.msra.mxu0 0.0
      %350 = vmatprep.subr.mxu0 0.0
      %351 = vmatpush1.msra.mxu0 0.0
      %352 = vmatprep.subr.mxu0 0.0
      %353 = vmatpush1.msra.mxu0 0.0
      %354 = vmatprep.subr.mxu0 0.0
      %355 = vmatpush1.msra.mxu0 0.0
      %356 = vmatprep.subr.mxu0 0.0
      %357 = vmatpush1.msra.mxu0 0.0
      %358 = vmatprep.subr.mxu0 0.0
      %359 = vmatpush1.msra.mxu0 0.0
      %360 = vmatprep.subr.mxu0 0.0
      %361 = vmatpush1.msra.mxu0 0.0
      %362 = vmatprep.subr.mxu0 0.0
      %363 = vmatpush1.msra.mxu0 0.0
      %364 = vmatprep.subr.mxu0 0.0
      %365 = vmatpush1.msra.mxu0 0.0
      %366 = vmatprep.subr.mxu0 0.0
      %367 = vmatpush1.msra.mxu0 0.0
      %368 = vmatprep.subr.mxu0 0.0
      %369 = vmatpush1.msra.mxu0 0.0
      %370 = vmatprep.subr.mxu0 0.0
      %371 = vmatpush1.msra.mxu0 0.0
      %372 = vmatprep.subr.mxu0 0.0
      %373 = vmatpush1.msra.mxu0 0.0
      %374 = vmatprep.subr.mxu0 0.0
      %375 = vmatpush1.msra.mxu0 0.0
      %376 = vmatprep.subr.mxu0 0.0
      %377 = vmatpush1.msra.mxu0 0.0
      %378 = vmatprep.subr.mxu0 0.0
      %379 = vmatpush1.msra.mxu0 0.0
      %380 = vmatprep.subr.mxu0 0.0
      %381 = vmatpush1.msra.mxu0 0.0
      %382 = vmatprep.subr.mxu0 0.0
      %383 = vmatpush1.msra.mxu0 0.0
      %384 = vmatprep.subr.mxu0 0.0
      %385 = vmatpush1.msra.mxu0 0.0
      %386 = vmatprep.subr.mxu0 0.0
      %387 = vmatpush1.msra.mxu0 0.0
      %388 = vmatprep.subr.mxu0 0.0
      %389 = vmatpush1.msra.mxu0 0.0
      %390 = vmatprep.subr.mxu0 0.0
      %391 = vmatpush1.msra.mxu0 0.0
      %392 = vmatprep.subr.mxu0 0.0
      %393 = vmatpush1.msra.mxu0 0.0
      %394 = vmatprep.subr.mxu0 0.0
      %395 = vmatpush1.msra.mxu0 0.0
      %396 = vmatprep.mubr.f32.mxu0 0.0
      %397 = vmatmul.mubr.f32.gmra.mrb[0].mxu0 %v323
      %v398 = vpop.f32.mrb[0].mxu0
      %v399 = vadd.f32 0.0, %v398
      %v400 = vpop.f32.mrb[0].mxu0
      %v401 = vadd.f32 0.0, %v400
      %402 = vdwg.mxu0
      %v404 = vsel %vm321, %v296, 0
      %v407 = vsel %vm325, %v294, 0
      %v410 = vsel %vm325, %v295, 0
      %412 = vmatprep.subr.mxu0 %v410
      %413 = vmatpush1.msra.mxu0 %v407
      %414 = vmatprep.subr.mxu0 0.0
      %415 = vmatpush1.msra.mxu0 0.0
      %416 = vmatprep.subr.mxu0 0.0
      %417 = vmatpush1.msra.mxu0 0.0
      %418 = vmatprep.subr.mxu0 0.0
      %419 = vmatpush1.msra.mxu0 0.0
      %420 = vmatprep.subr.mxu0 0.0
      %421 = vmatpush1.msra.mxu0 0.0
      %422 = vmatprep.subr.mxu0 0.0
      %423 = vmatpush1.msra.mxu0 0.0
      %424 = vmatprep.subr.mxu0 0.0
      %425 = vmatpush1.msra.mxu0 0.0
      %426 = vmatprep.subr.mxu0 0.0
      %427 = vmatpush1.msra.mxu0 0.0
      %428 = vmatprep.subr.mxu0 0.0
      %429 = vmatpush1.msra.mxu0 0.0
      %430 = vmatprep.subr.mxu0 0.0
      %431 = vmatpush1.msra.mxu0 0.0
      %432 = vmatprep.subr.mxu0 0.0
      %433 = vmatpush1.msra.mxu0 0.0
      %434 = vmatprep.subr.mxu0 0.0
      %435 = vmatpush1.msra.mxu0 0.0
      %436 = vmatprep.subr.mxu0 0.0
      %437 = vmatpush1.msra.mxu0 0.0
      %438 = vmatprep.subr.mxu0 0.0
      %439 = vmatpush1.msra.mxu0 0.0
      %440 = vmatprep.subr.mxu0 0.0
      %441 = vmatpush1.msra.mxu0 0.0
      %442 = vmatprep.subr.mxu0 0.0
      %443 = vmatpush1.msra.mxu0 0.0
      %444 = vmatprep.subr.mxu0 0.0
      %445 = vmatpush1.msra.mxu0 0.0
      %446 = vmatprep.subr.mxu0 0.0
      %447 = vmatpush1.msra.mxu0 0.0
      %448 = vmatprep.subr.mxu0 0.0
      %449 = vmatpush1.msra.mxu0 0.0
      %450 = vmatprep.subr.mxu0 0.0
      %451 = vmatpush1.msra.mxu0 0.0
      %452 = vmatprep.subr.mxu0 0.0
      %453 = vmatpush1.msra.mxu0 0.0
      %454 = vmatprep.subr.mxu0 0.0
      %455 = vmatpush1.msra.mxu0 0.0
      %456 = vmatprep.subr.mxu0 0.0
      %457 = vmatpush1.msra.mxu0 0.0
      %458 = vmatprep.subr.mxu0 0.0
      %459 = vmatpush1.msra.mxu0 0.0
      %460 = vmatprep.subr.mxu0 0.0
      %461 = vmatpush1.msra.mxu0 0.0
      %462 = vmatprep.subr.mxu0 0.0
      %463 = vmatpush1.msra.mxu0 0.0
      %464 = vmatprep.subr.mxu0 0.0
      %465 = vmatpush1.msra.mxu0 0.0
      %466 = vmatprep.subr.mxu0 0.0
      %467 = vmatpush1.msra.mxu0 0.0
      %468 = vmatprep.subr.mxu0 0.0
      %469 = vmatpush1.msra.mxu0 0.0
      %470 = vmatprep.subr.mxu0 0.0
      %471 = vmatpush1.msra.mxu0 0.0
      %472 = vmatprep.subr.mxu0 0.0
      %473 = vmatpush1.msra.mxu0 0.0
      %474 = vmatprep.subr.mxu0 0.0
      %475 = vmatpush1.msra.mxu0 0.0
      %476 = vmatprep.mubr.f32.mxu0 0.0
      %477 = vmatmul.mubr.f32.gmra.mrb[0].mxu0 %v404
      %v478 = vpop.f32.mrb[0].mxu0
      %v479 = vadd.f32 %v399, %v478
      %v480 = vpop.f32.mrb[0].mxu0
      %v481 = vadd.f32 %v401, %v480
      %482 = vdwg.mxu0
      %483 = vrot.lane.b32.xlu0 %v269, 15
      %v484 = vpop.permute.xlu0 %483
      %485 = vrot.lane.b32.xlu0 %v271, 15
      %v486 = vpop.permute.xlu0 %485
      %vm487 = vcmp.lt.s32.totalorder %v278, 15
      %v488 = vsel %vm487, %v484, %v486
      %v489 = vsel %vm487, %v486, %v484
      %s490 = scalar_lea.vmem %s3, 2
      %v491 = vld [vmem:[%s490] ss:$8 sm:$0x3]
      %v493 = vlaneseq
      %v494 = vshrl.u32 %v493, 7
      %v495 = vsub.s32 0, %v494
      %v496 = vrot.slane %v491, %v495
      %v497 = vlaneseq
      %v498 = vshrl.u32 %v497, 7
      %v499 = vsub.s32 1, %v498
      %v500 = vrot.slane %v491, %v499
      %v503 = vmul.f32 %v489, %v496
      %v504 = vmul.f32 %v488, %v500
      %s505 = scalar_lea.vmem %s1, 8
      %v506 = vld [vmem:[%s505] sm:$0xf]
      %v508 = vsel %vm321, %v506, 0
      %v511 = vsel %vm325, %v503, 0
      %v514 = vsel %vm325, %v504, 0
      %516 = vmatprep.subr.mxu0 %v514
      %517 = vmatpush1.msra.mxu0 %v511
      %518 = vmatprep.subr.mxu0 0.0
      %519 = vmatpush1.msra.mxu0 0.0
      %520 = vmatprep.subr.mxu0 0.0
      %521 = vmatpush1.msra.mxu0 0.0
      %522 = vmatprep.subr.mxu0 0.0
      %523 = vmatpush1.msra.mxu0 0.0
      %524 = vmatprep.subr.mxu0 0.0
      %525 = vmatpush1.msra.mxu0 0.0
      %526 = vmatprep.subr.mxu0 0.0
      %527 = vmatpush1.msra.mxu0 0.0
      %528 = vmatprep.subr.mxu0 0.0
      %529 = vmatpush1.msra.mxu0 0.0
      %530 = vmatprep.subr.mxu0 0.0
      %531 = vmatpush1.msra.mxu0 0.0
      %532 = vmatprep.subr.mxu0 0.0
      %533 = vmatpush1.msra.mxu0 0.0
      %534 = vmatprep.subr.mxu0 0.0
      %535 = vmatpush1.msra.mxu0 0.0
      %536 = vmatprep.subr.mxu0 0.0
      %537 = vmatpush1.msra.mxu0 0.0
      %538 = vmatprep.subr.mxu0 0.0
      %539 = vmatpush1.msra.mxu0 0.0
      %540 = vmatprep.subr.mxu0 0.0
      %541 = vmatpush1.msra.mxu0 0.0
      %542 = vmatprep.subr.mxu0 0.0
      %543 = vmatpush1.msra.mxu0 0.0
      %544 = vmatprep.subr.mxu0 0.0
      %545 = vmatpush1.msra.mxu0 0.0
      %546 = vmatprep.subr.mxu0 0.0
      %547 = vmatpush1.msra.mxu0 0.0
      %548 = vmatprep.subr.mxu0 0.0
      %549 = vmatpush1.msra.mxu0 0.0
      %550 = vmatprep.subr.mxu0 0.0
      %551 = vmatpush1.msra.mxu0 0.0
      %552 = vmatprep.subr.mxu0 0.0
      %553 = vmatpush1.msra.mxu0 0.0
      %554 = vmatprep.subr.mxu0 0.0
      %555 = vmatpush1.msra.mxu0 0.0
      %556 = vmatprep.subr.mxu0 0.0
      %557 = vmatpush1.msra.mxu0 0.0
      %558 = vmatprep.subr.mxu0 0.0
      %559 = vmatpush1.msra.mxu0 0.0
      %560 = vmatprep.subr.mxu0 0.0
      %561 = vmatpush1.msra.mxu0 0.0
      %562 = vmatprep.subr.mxu0 0.0
      %563 = vmatpush1.msra.mxu0 0.0
      %564 = vmatprep.subr.mxu0 0.0
      %565 = vmatpush1.msra.mxu0 0.0
      %566 = vmatprep.subr.mxu0 0.0
      %567 = vmatpush1.msra.mxu0 0.0
      %568 = vmatprep.subr.mxu0 0.0
      %569 = vmatpush1.msra.mxu0 0.0
      %570 = vmatprep.subr.mxu0 0.0
      %571 = vmatpush1.msra.mxu0 0.0
      %572 = vmatprep.subr.mxu0 0.0
      %573 = vmatpush1.msra.mxu0 0.0
      %574 = vmatprep.subr.mxu0 0.0
      %575 = vmatpush1.msra.mxu0 0.0
      %576 = vmatprep.subr.mxu0 0.0
      %577 = vmatpush1.msra.mxu0 0.0
      %578 = vmatprep.subr.mxu0 0.0
      %579 = vmatpush1.msra.mxu0 0.0
      %580 = vmatprep.mubr.f32.mxu0 0.0
      %581 = vmatmul.mubr.f32.gmra.mrb[0].mxu0 %v508
      %v582 = vpop.f32.mrb[0].mxu0
      %v583 = vadd.f32 0.0, %v582
      %v584 = vpop.f32.mrb[0].mxu0
      %v585 = vadd.f32 0.0, %v584
      %586 = vdwg.mxu0
      %v587 = vadd.f32 %v479, %v583
      %v588 = vadd.f32 %v481, %v585
      %589 = vrot.lane.b32.xlu0 %v269, 1
      %v590 = vpop.permute.xlu0 %589
      %591 = vrot.lane.b32.xlu0 %v271, 1
      %v592 = vpop.permute.xlu0 %591
      %vm593 = vcmp.lt.s32.totalorder %v278, 1
      %v594 = vsel %vm593, %v590, %v592
      %v595 = vsel %vm593, %v592, %v590
      %s596 = scalar_lea.vmem %s3, 3
      %v597 = vld [vmem:[%s596] ss:$8 sm:$0x3]
      %v599 = vlaneseq
      %v600 = vshrl.u32 %v599, 7
      %v601 = vsub.s32 0, %v600
      %v602 = vrot.slane %v597, %v601
      %v603 = vlaneseq
      %v604 = vshrl.u32 %v603, 7
      %v605 = vsub.s32 1, %v604
      %v606 = vrot.slane %v597, %v605
      %v609 = vmul.f32 %v595, %v602
      %v610 = vmul.f32 %v594, %v606
      %s611 = scalar_lea.vmem %s1, 12
      %v612 = vld [vmem:[%s611] sm:$0xf]
      %v614 = vsel %vm321, %v612, 0
      %v617 = vsel %vm325, %v609, 0
      %v620 = vsel %vm325, %v610, 0
      %622 = vmatprep.subr.mxu0 %v620
      %623 = vmatpush1.msra.mxu0 %v617
      %624 = vmatprep.subr.mxu0 0.0
      %625 = vmatpush1.msra.mxu0 0.0
      %626 = vmatprep.subr.mxu0 0.0
      %627 = vmatpush1.msra.mxu0 0.0
      %628 = vmatprep.subr.mxu0 0.0
      %629 = vmatpush1.msra.mxu0 0.0
      %630 = vmatprep.subr.mxu0 0.0
      %631 = vmatpush1.msra.mxu0 0.0
      %632 = vmatprep.subr.mxu0 0.0
      %633 = vmatpush1.msra.mxu0 0.0
      %634 = vmatprep.subr.mxu0 0.0
      %635 = vmatpush1.msra.mxu0 0.0
      %636 = vmatprep.subr.mxu0 0.0
      %637 = vmatpush1.msra.mxu0 0.0
      %638 = vmatprep.subr.mxu0 0.0
      %639 = vmatpush1.msra.mxu0 0.0
      %640 = vmatprep.subr.mxu0 0.0
      %641 = vmatpush1.msra.mxu0 0.0
      %642 = vmatprep.subr.mxu0 0.0
      %643 = vmatpush1.msra.mxu0 0.0
      %644 = vmatprep.subr.mxu0 0.0
      %645 = vmatpush1.msra.mxu0 0.0
      %646 = vmatprep.subr.mxu0 0.0
      %647 = vmatpush1.msra.mxu0 0.0
      %648 = vmatprep.subr.mxu0 0.0
      %649 = vmatpush1.msra.mxu0 0.0
      %650 = vmatprep.subr.mxu0 0.0
      %651 = vmatpush1.msra.mxu0 0.0
      %652 = vmatprep.subr.mxu0 0.0
      %653 = vmatpush1.msra.mxu0 0.0
      %654 = vmatprep.subr.mxu0 0.0
      %655 = vmatpush1.msra.mxu0 0.0
      %656 = vmatprep.subr.mxu0 0.0
      %657 = vmatpush1.msra.mxu0 0.0
      %658 = vmatprep.subr.mxu0 0.0
      %659 = vmatpush1.msra.mxu0 0.0
      %660 = vmatprep.subr.mxu0 0.0
      %661 = vmatpush1.msra.mxu0 0.0
      %662 = vmatprep.subr.mxu0 0.0
      %663 = vmatpush1.msra.mxu0 0.0
      %664 = vmatprep.subr.mxu0 0.0
      %665 = vmatpush1.msra.mxu0 0.0
      %666 = vmatprep.subr.mxu0 0.0
      %667 = vmatpush1.msra.mxu0 0.0
      %668 = vmatprep.subr.mxu0 0.0
      %669 = vmatpush1.msra.mxu0 0.0
      %670 = vmatprep.subr.mxu0 0.0
      %671 = vmatpush1.msra.mxu0 0.0
      %672 = vmatprep.subr.mxu0 0.0
      %673 = vmatpush1.msra.mxu0 0.0
      %674 = vmatprep.subr.mxu0 0.0
      %675 = vmatpush1.msra.mxu0 0.0
      %676 = vmatprep.subr.mxu0 0.0
      %677 = vmatpush1.msra.mxu0 0.0
      %678 = vmatprep.subr.mxu0 0.0
      %679 = vmatpush1.msra.mxu0 0.0
      %680 = vmatprep.subr.mxu0 0.0
      %681 = vmatpush1.msra.mxu0 0.0
      %682 = vmatprep.subr.mxu0 0.0
      %683 = vmatpush1.msra.mxu0 0.0
      %684 = vmatprep.subr.mxu0 0.0
      %685 = vmatpush1.msra.mxu0 0.0
      %686 = vmatprep.mubr.f32.mxu0 0.0
      %687 = vmatmul.mubr.f32.gmra.mrb[0].mxu0 %v614
      %v688 = vpop.f32.mrb[0].mxu0
      %v689 = vadd.f32 0.0, %v688
      %v690 = vpop.f32.mrb[0].mxu0
      %v691 = vadd.f32 0.0, %v690
      %692 = vdwg.mxu0
      %v693 = vadd.f32 %v587, %v689
      %v694 = vadd.f32 %v588, %v691
      %s695 = scalar_lea.vmem %s1, 16
      %v696 = vld [vmem:[%s695] sm:$0xf]
      %v698 = vsel %vm321, %v696, 0
      %v700 = vsel %vm325, %v269, 0
      %v702 = vsel %vm325, %v271, 0
      %704 = vmatprep.subr.mxu0 %v702
      %705 = vmatpush1.msra.mxu0 %v700
      %706 = vmatprep.subr.mxu0 0.0
      %707 = vmatpush1.msra.mxu0 0.0
      %708 = vmatprep.subr.mxu0 0.0
      %709 = vmatpush1.msra.mxu0 0.0
      %710 = vmatprep.subr.mxu0 0.0
      %711 = vmatpush1.msra.mxu0 0.0
      %712 = vmatprep.subr.mxu0 0.0
      %713 = vmatpush1.msra.mxu0 0.0
      %714 = vmatprep.subr.mxu0 0.0
      %715 = vmatpush1.msra.mxu0 0.0
      %716 = vmatprep.subr.mxu0 0.0
      %717 = vmatpush1.msra.mxu0 0.0
      %718 = vmatprep.subr.mxu0 0.0
      %719 = vmatpush1.msra.mxu0 0.0
      %720 = vmatprep.subr.mxu0 0.0
      %721 = vmatpush1.msra.mxu0 0.0
      %722 = vmatprep.subr.mxu0 0.0
      %723 = vmatpush1.msra.mxu0 0.0
      %724 = vmatprep.subr.mxu0 0.0
      %725 = vmatpush1.msra.mxu0 0.0
      %726 = vmatprep.subr.mxu0 0.0
      %727 = vmatpush1.msra.mxu0 0.0
      %728 = vmatprep.subr.mxu0 0.0
      %729 = vmatpush1.msra.mxu0 0.0
      %730 = vmatprep.subr.mxu0 0.0
      %731 = vmatpush1.msra.mxu0 0.0
      %732 = vmatprep.subr.mxu0 0.0
      %733 = vmatpush1.msra.mxu0 0.0
      %734 = vmatprep.subr.mxu0 0.0
      %735 = vmatpush1.msra.mxu0 0.0
      %736 = vmatprep.subr.mxu0 0.0
      %737 = vmatpush1.msra.mxu0 0.0
      %738 = vmatprep.subr.mxu0 0.0
      %739 = vmatpush1.msra.mxu0 0.0
      %740 = vmatprep.subr.mxu0 0.0
      %741 = vmatpush1.msra.mxu0 0.0
      %742 = vmatprep.subr.mxu0 0.0
      %743 = vmatpush1.msra.mxu0 0.0
      %744 = vmatprep.subr.mxu0 0.0
      %745 = vmatpush1.msra.mxu0 0.0
      %746 = vmatprep.subr.mxu0 0.0
      %747 = vmatpush1.msra.mxu0 0.0
      %748 = vmatprep.subr.mxu0 0.0
      %749 = vmatpush1.msra.mxu0 0.0
      %750 = vmatprep.subr.mxu0 0.0
      %751 = vmatpush1.msra.mxu0 0.0
      %752 = vmatprep.subr.mxu0 0.0
      %753 = vmatpush1.msra.mxu0 0.0
      %754 = vmatprep.subr.mxu0 0.0
      %755 = vmatpush1.msra.mxu0 0.0
      %756 = vmatprep.subr.mxu0 0.0
      %757 = vmatpush1.msra.mxu0 0.0
      %758 = vmatprep.subr.mxu0 0.0
      %759 = vmatpush1.msra.mxu0 0.0
      %760 = vmatprep.subr.mxu0 0.0
      %761 = vmatpush1.msra.mxu0 0.0
      %762 = vmatprep.subr.mxu0 0.0
      %763 = vmatpush1.msra.mxu0 0.0
      %764 = vmatprep.subr.mxu0 0.0
      %765 = vmatpush1.msra.mxu0 0.0
      %766 = vmatprep.subr.mxu0 0.0
      %767 = vmatpush1.msra.mxu0 0.0
      %768 = vmatprep.mubr.f32.mxu0 0.0
      %769 = vmatmul.mubr.f32.gmra.mrb[0].mxu0 %v698
      %v770 = vpop.f32.mrb[0].mxu0
      %v771 = vadd.f32 0.0, %v770
      %v772 = vpop.f32.mrb[0].mxu0
      %v773 = vadd.f32 0.0, %v772
      %774 = vdwg.mxu0
      %v775 = vadd.f32 %v693, %v771
      %v776 = vadd.f32 %v694, %v773
      %777 = vrot.lane.b32.xlu0 %v269, 127
      %v778 = vpop.permute.xlu0 %777
      %779 = vrot.lane.b32.xlu0 %v271, 127
      %v780 = vpop.permute.xlu0 %779
      %vm781 = vcmp.lt.s32.totalorder %v278, 127
      %v782 = vsel %vm781, %v778, %v780
      %v783 = vsel %vm781, %v780, %v778
      %s784 = scalar_lea.vmem %s3, 5
      %v785 = vld [vmem:[%s784] ss:$8 sm:$0x3]
      %v787 = vlaneseq
      %v788 = vshrl.u32 %v787, 7
      %v789 = vsub.s32 0, %v788
      %v790 = vrot.slane %v785, %v789
      %v791 = vlaneseq
      %v792 = vshrl.u32 %v791, 7
      %v793 = vsub.s32 1, %v792
      %v794 = vrot.slane %v785, %v793
      %v797 = vmul.f32 %v782, %v790
      %v798 = vmul.f32 %v783, %v794
      %s799 = scalar_lea.vmem %s1, 20
      %v800 = vld [vmem:[%s799] sm:$0xf]
      %v802 = vsel %vm321, %v800, 0
      %v805 = vsel %vm325, %v797, 0
      %v808 = vsel %vm325, %v798, 0
      %810 = vmatprep.subr.mxu0 %v808
      %811 = vmatpush1.msra.mxu0 %v805
      %812 = vmatprep.subr.mxu0 0.0
      %813 = vmatpush1.msra.mxu0 0.0
      %814 = vmatprep.subr.mxu0 0.0
      %815 = vmatpush1.msra.mxu0 0.0
      %816 = vmatprep.subr.mxu0 0.0
      %817 = vmatpush1.msra.mxu0 0.0
      %818 = vmatprep.subr.mxu0 0.0
      %819 = vmatpush1.msra.mxu0 0.0
      %820 = vmatprep.subr.mxu0 0.0
      %821 = vmatpush1.msra.mxu0 0.0
      %822 = vmatprep.subr.mxu0 0.0
      %823 = vmatpush1.msra.mxu0 0.0
      %824 = vmatprep.subr.mxu0 0.0
      %825 = vmatpush1.msra.mxu0 0.0
      %826 = vmatprep.subr.mxu0 0.0
      %827 = vmatpush1.msra.mxu0 0.0
      %828 = vmatprep.subr.mxu0 0.0
      %829 = vmatpush1.msra.mxu0 0.0
      %830 = vmatprep.subr.mxu0 0.0
      %831 = vmatpush1.msra.mxu0 0.0
      %832 = vmatprep.subr.mxu0 0.0
      %833 = vmatpush1.msra.mxu0 0.0
      %834 = vmatprep.subr.mxu0 0.0
      %835 = vmatpush1.msra.mxu0 0.0
      %836 = vmatprep.subr.mxu0 0.0
      %837 = vmatpush1.msra.mxu0 0.0
      %838 = vmatprep.subr.mxu0 0.0
      %839 = vmatpush1.msra.mxu0 0.0
      %840 = vmatprep.subr.mxu0 0.0
      %841 = vmatpush1.msra.mxu0 0.0
      %842 = vmatprep.subr.mxu0 0.0
      %843 = vmatpush1.msra.mxu0 0.0
      %844 = vmatprep.subr.mxu0 0.0
      %845 = vmatpush1.msra.mxu0 0.0
      %846 = vmatprep.subr.mxu0 0.0
      %847 = vmatpush1.msra.mxu0 0.0
      %848 = vmatprep.subr.mxu0 0.0
      %849 = vmatpush1.msra.mxu0 0.0
      %850 = vmatprep.subr.mxu0 0.0
      %851 = vmatpush1.msra.mxu0 0.0
      %852 = vmatprep.subr.mxu0 0.0
      %853 = vmatpush1.msra.mxu0 0.0
      %854 = vmatprep.subr.mxu0 0.0
      %855 = vmatpush1.msra.mxu0 0.0
      %856 = vmatprep.subr.mxu0 0.0
      %857 = vmatpush1.msra.mxu0 0.0
      %858 = vmatprep.subr.mxu0 0.0
      %859 = vmatpush1.msra.mxu0 0.0
      %860 = vmatprep.subr.mxu0 0.0
      %861 = vmatpush1.msra.mxu0 0.0
      %862 = vmatprep.subr.mxu0 0.0
      %863 = vmatpush1.msra.mxu0 0.0
      %864 = vmatprep.subr.mxu0 0.0
      %865 = vmatpush1.msra.mxu0 0.0
      %866 = vmatprep.subr.mxu0 0.0
      %867 = vmatpush1.msra.mxu0 0.0
      %868 = vmatprep.subr.mxu0 0.0
      %869 = vmatpush1.msra.mxu0 0.0
      %870 = vmatprep.subr.mxu0 0.0
      %871 = vmatpush1.msra.mxu0 0.0
      %872 = vmatprep.subr.mxu0 0.0
      %873 = vmatpush1.msra.mxu0 0.0
      %874 = vmatprep.mubr.f32.mxu0 0.0
      %875 = vmatmul.mubr.f32.gmra.mrb[0].mxu0 %v802
      %v876 = vpop.f32.mrb[0].mxu0
      %v877 = vadd.f32 0.0, %v876
      %v878 = vpop.f32.mrb[0].mxu0
      %v879 = vadd.f32 0.0, %v878
      %880 = vdwg.mxu0
      %v881 = vadd.f32 %v775, %v877
      %v882 = vadd.f32 %v776, %v879
      %883 = vrot.lane.b32.xlu0 %v269, 113
      %v884 = vpop.permute.xlu0 %883
      %885 = vrot.lane.b32.xlu0 %v271, 113
      %v886 = vpop.permute.xlu0 %885
      %vm887 = vcmp.lt.s32.totalorder %v278, 113
      %v888 = vsel %vm887, %v884, %v886
      %v889 = vsel %vm887, %v886, %v884
      %s890 = scalar_lea.vmem %s3, 6
      %v891 = vld [vmem:[%s890] ss:$8 sm:$0x3]
      %v893 = vlaneseq
      %v894 = vshrl.u32 %v893, 7
      %v895 = vsub.s32 0, %v894
      %v896 = vrot.slane %v891, %v895
      %v897 = vlaneseq
      %v898 = vshrl.u32 %v897, 7
      %v899 = vsub.s32 1, %v898
      %v900 = vrot.slane %v891, %v899
      %v903 = vmul.f32 %v888, %v896
      %v904 = vmul.f32 %v889, %v900
      %s905 = scalar_lea.vmem %s1, 24
      %v906 = vld [vmem:[%s905] sm:$0xf]
      %v908 = vsel %vm321, %v906, 0
      %v911 = vsel %vm325, %v903, 0
      %v914 = vsel %vm325, %v904, 0
      %916 = vmatprep.subr.mxu0 %v914
      %917 = vmatpush1.msra.mxu0 %v911
      %918 = vmatprep.subr.mxu0 0.0
      %919 = vmatpush1.msra.mxu0 0.0
      %920 = vmatprep.subr.mxu0 0.0
      %921 = vmatpush1.msra.mxu0 0.0
      %922 = vmatprep.subr.mxu0 0.0
      %923 = vmatpush1.msra.mxu0 0.0
      %924 = vmatprep.subr.mxu0 0.0
      %925 = vmatpush1.msra.mxu0 0.0
      %926 = vmatprep.subr.mxu0 0.0
      %927 = vmatpush1.msra.mxu0 0.0
      %928 = vmatprep.subr.mxu0 0.0
      %929 = vmatpush1.msra.mxu0 0.0
      %930 = vmatprep.subr.mxu0 0.0
      %931 = vmatpush1.msra.mxu0 0.0
      %932 = vmatprep.subr.mxu0 0.0
      %933 = vmatpush1.msra.mxu0 0.0
      %934 = vmatprep.subr.mxu0 0.0
      %935 = vmatpush1.msra.mxu0 0.0
      %936 = vmatprep.subr.mxu0 0.0
      %937 = vmatpush1.msra.mxu0 0.0
      %938 = vmatprep.subr.mxu0 0.0
      %939 = vmatpush1.msra.mxu0 0.0
      %940 = vmatprep.subr.mxu0 0.0
      %941 = vmatpush1.msra.mxu0 0.0
      %942 = vmatprep.subr.mxu0 0.0
      %943 = vmatpush1.msra.mxu0 0.0
      %944 = vmatprep.subr.mxu0 0.0
      %945 = vmatpush1.msra.mxu0 0.0
      %946 = vmatprep.subr.mxu0 0.0
      %947 = vmatpush1.msra.mxu0 0.0
      %948 = vmatprep.subr.mxu0 0.0
      %949 = vmatpush1.msra.mxu0 0.0
      %950 = vmatprep.subr.mxu0 0.0
      %951 = vmatpush1.msra.mxu0 0.0
      %952 = vmatprep.subr.mxu0 0.0
      %953 = vmatpush1.msra.mxu0 0.0
      %954 = vmatprep.subr.mxu0 0.0
      %955 = vmatpush1.msra.mxu0 0.0
      %956 = vmatprep.subr.mxu0 0.0
      %957 = vmatpush1.msra.mxu0 0.0
      %958 = vmatprep.subr.mxu0 0.0
      %959 = vmatpush1.msra.mxu0 0.0
      %960 = vmatprep.subr.mxu0 0.0
      %961 = vmatpush1.msra.mxu0 0.0
      %962 = vmatprep.subr.mxu0 0.0
      %963 = vmatpush1.msra.mxu0 0.0
      %964 = vmatprep.subr.mxu0 0.0
      %965 = vmatpush1.msra.mxu0 0.0
      %966 = vmatprep.subr.mxu0 0.0
      %967 = vmatpush1.msra.mxu0 0.0
      %968 = vmatprep.subr.mxu0 0.0
      %969 = vmatpush1.msra.mxu0 0.0
      %970 = vmatprep.subr.mxu0 0.0
      %971 = vmatpush1.msra.mxu0 0.0
      %972 = vmatprep.subr.mxu0 0.0
      %973 = vmatpush1.msra.mxu0 0.0
      %974 = vmatprep.subr.mxu0 0.0
      %975 = vmatpush1.msra.mxu0 0.0
      %976 = vmatprep.subr.mxu0 0.0
      %977 = vmatpush1.msra.mxu0 0.0
      %978 = vmatprep.subr.mxu0 0.0
      %979 = vmatpush1.msra.mxu0 0.0
      %980 = vmatprep.mubr.f32.mxu0 0.0
      %981 = vmatmul.mubr.f32.gmra.mrb[0].mxu0 %v908
      %v982 = vpop.f32.mrb[0].mxu0
      %v983 = vadd.f32 0.0, %v982
      %v984 = vpop.f32.mrb[0].mxu0
      %v985 = vadd.f32 0.0, %v984
      %986 = vdwg.mxu0
      %v987 = vadd.f32 %v881, %v983
      %v988 = vadd.f32 %v882, %v985
      %989 = vrot.lane.b32.xlu0 %v269, 112
      %v990 = vpop.permute.xlu0 %989
      %991 = vrot.lane.b32.xlu0 %v271, 112
      %v992 = vpop.permute.xlu0 %991
      %vm993 = vcmp.lt.s32.totalorder %v278, 112
      %v994 = vsel %vm993, %v990, %v992
      %v995 = vsel %vm993, %v992, %v990
      %s996 = scalar_lea.vmem %s3, 7
      %v997 = vld [vmem:[%s996] ss:$8 sm:$0x3]
      %v999 = vlaneseq
      %v1000 = vshrl.u32 %v999, 7
      %v1001 = vsub.s32 0, %v1000
      %v1002 = vrot.slane %v997, %v1001
      %v1003 = vlaneseq
      %v1004 = vshrl.u32 %v1003, 7
      %v1005 = vsub.s32 1, %v1004
      %v1006 = vrot.slane %v997, %v1005
      %v1009 = vmul.f32 %v994, %v1002
      %v1010 = vmul.f32 %v995, %v1006
      %s1011 = scalar_lea.vmem %s1, 28
      %v1012 = vld [vmem:[%s1011] sm:$0xf]
      %v1014 = vsel %vm321, %v1012, 0
      %v1017 = vsel %vm325, %v1009, 0
      %v1020 = vsel %vm325, %v1010, 0
      %1022 = vmatprep.subr.mxu0 %v1020
      %1023 = vmatpush1.msra.mxu0 %v1017
      %1024 = vmatprep.subr.mxu0 0.0
      %1025 = vmatpush1.msra.mxu0 0.0
      %1026 = vmatprep.subr.mxu0 0.0
      %1027 = vmatpush1.msra.mxu0 0.0
      %1028 = vmatprep.subr.mxu0 0.0
      %1029 = vmatpush1.msra.mxu0 0.0
      %1030 = vmatprep.subr.mxu0 0.0
      %1031 = vmatpush1.msra.mxu0 0.0
      %1032 = vmatprep.subr.mxu0 0.0
      %1033 = vmatpush1.msra.mxu0 0.0
      %1034 = vmatprep.subr.mxu0 0.0
      %1035 = vmatpush1.msra.mxu0 0.0
      %1036 = vmatprep.subr.mxu0 0.0
      %1037 = vmatpush1.msra.mxu0 0.0
      %1038 = vmatprep.subr.mxu0 0.0
      %1039 = vmatpush1.msra.mxu0 0.0
      %1040 = vmatprep.subr.mxu0 0.0
      %1041 = vmatpush1.msra.mxu0 0.0
      %1042 = vmatprep.subr.mxu0 0.0
      %1043 = vmatpush1.msra.mxu0 0.0
      %1044 = vmatprep.subr.mxu0 0.0
      %1045 = vmatpush1.msra.mxu0 0.0
      %1046 = vmatprep.subr.mxu0 0.0
      %1047 = vmatpush1.msra.mxu0 0.0
      %1048 = vmatprep.subr.mxu0 0.0
      %1049 = vmatpush1.msra.mxu0 0.0
      %1050 = vmatprep.subr.mxu0 0.0
      %1051 = vmatpush1.msra.mxu0 0.0
      %1052 = vmatprep.subr.mxu0 0.0
      %1053 = vmatpush1.msra.mxu0 0.0
      %1054 = vmatprep.subr.mxu0 0.0
      %1055 = vmatpush1.msra.mxu0 0.0
      %1056 = vmatprep.subr.mxu0 0.0
      %1057 = vmatpush1.msra.mxu0 0.0
      %1058 = vmatprep.subr.mxu0 0.0
      %1059 = vmatpush1.msra.mxu0 0.0
      %1060 = vmatprep.subr.mxu0 0.0
      %1061 = vmatpush1.msra.mxu0 0.0
      %1062 = vmatprep.subr.mxu0 0.0
      %1063 = vmatpush1.msra.mxu0 0.0
      %1064 = vmatprep.subr.mxu0 0.0
      %1065 = vmatpush1.msra.mxu0 0.0
      %1066 = vmatprep.subr.mxu0 0.0
      %1067 = vmatpush1.msra.mxu0 0.0
      %1068 = vmatprep.subr.mxu0 0.0
      %1069 = vmatpush1.msra.mxu0 0.0
      %1070 = vmatprep.subr.mxu0 0.0
      %1071 = vmatpush1.msra.mxu0 0.0
      %1072 = vmatprep.subr.mxu0 0.0
      %1073 = vmatpush1.msra.mxu0 0.0
      %1074 = vmatprep.subr.mxu0 0.0
      %1075 = vmatpush1.msra.mxu0 0.0
      %1076 = vmatprep.subr.mxu0 0.0
      %1077 = vmatpush1.msra.mxu0 0.0
      %1078 = vmatprep.subr.mxu0 0.0
      %1079 = vmatpush1.msra.mxu0 0.0
      %1080 = vmatprep.subr.mxu0 0.0
      %1081 = vmatpush1.msra.mxu0 0.0
      %1082 = vmatprep.subr.mxu0 0.0
      %1083 = vmatpush1.msra.mxu0 0.0
      %1084 = vmatprep.subr.mxu0 0.0
      %1085 = vmatpush1.msra.mxu0 0.0
      %1086 = vmatprep.mubr.f32.mxu0 0.0
      %1087 = vmatmul.mubr.f32.gmra.mrb[0].mxu0 %v1014
      %v1088 = vpop.f32.mrb[0].mxu0
      %v1089 = vadd.f32 0.0, %v1088
      %v1090 = vpop.f32.mrb[0].mxu0
      %v1091 = vadd.f32 0.0, %v1090
      %1092 = vdwg.mxu0
      %v1093 = vadd.f32 %v987, %v1089
      %v1094 = vadd.f32 %v988, %v1091
      %1095 = vrot.lane.b32.xlu0 %v269, 111
      %v1096 = vpop.permute.xlu0 %1095
      %1097 = vrot.lane.b32.xlu0 %v271, 111
      %v1098 = vpop.permute.xlu0 %1097
      %vm1099 = vcmp.lt.s32.totalorder %v278, 111
      %v1100 = vsel %vm1099, %v1096, %v1098
      %v1101 = vsel %vm1099, %v1098, %v1096
      %s1102 = scalar_lea.vmem %s3, 16
      %v1103 = vld [vmem:[%s1102] ss:$8 sm:$0x3]
      %v1105 = vlaneseq
      %v1106 = vshrl.u32 %v1105, 7
      %v1107 = vsub.s32 0, %v1106
      %v1108 = vrot.slane %v1103, %v1107
      %v1109 = vlaneseq
      %v1110 = vshrl.u32 %v1109, 7
      %v1111 = vsub.s32 1, %v1110
      %v1112 = vrot.slane %v1103, %v1111
      %v1115 = vmul.f32 %v1100, %v1108
      %v1116 = vmul.f32 %v1101, %v1112
      %s1117 = scalar_lea.vmem %s1, 32
      %v1118 = vld [vmem:[%s1117] sm:$0xf]
      %v1120 = vsel %vm321, %v1118, 0
      %v1123 = vsel %vm325, %v1115, 0
      %v1126 = vsel %vm325, %v1116, 0
      %1128 = vmatprep.subr.mxu0 %v1126
      %1129 = vmatpush1.msra.mxu0 %v1123
      %1130 = vmatprep.subr.mxu0 0.0
      %1131 = vmatpush1.msra.mxu0 0.0
      %1132 = vmatprep.subr.mxu0 0.0
      %1133 = vmatpush1.msra.mxu0 0.0
      %1134 = vmatprep.subr.mxu0 0.0
      %1135 = vmatpush1.msra.mxu0 0.0
      %1136 = vmatprep.subr.mxu0 0.0
      %1137 = vmatpush1.msra.mxu0 0.0
      %1138 = vmatprep.subr.mxu0 0.0
      %1139 = vmatpush1.msra.mxu0 0.0
      %1140 = vmatprep.subr.mxu0 0.0
      %1141 = vmatpush1.msra.mxu0 0.0
      %1142 = vmatprep.subr.mxu0 0.0
      %1143 = vmatpush1.msra.mxu0 0.0
      %1144 = vmatprep.subr.mxu0 0.0
      %1145 = vmatpush1.msra.mxu0 0.0
      %1146 = vmatprep.subr.mxu0 0.0
      %1147 = vmatpush1.msra.mxu0 0.0
      %1148 = vmatprep.subr.mxu0 0.0
      %1149 = vmatpush1.msra.mxu0 0.0
      %1150 = vmatprep.subr.mxu0 0.0
      %1151 = vmatpush1.msra.mxu0 0.0
      %1152 = vmatprep.subr.mxu0 0.0
      %1153 = vmatpush1.msra.mxu0 0.0
      %1154 = vmatprep.subr.mxu0 0.0
      %1155 = vmatpush1.msra.mxu0 0.0
      %1156 = vmatprep.subr.mxu0 0.0
      %1157 = vmatpush1.msra.mxu0 0.0
      %1158 = vmatprep.subr.mxu0 0.0
      %1159 = vmatpush1.msra.mxu0 0.0
      %1160 = vmatprep.subr.mxu0 0.0
      %1161 = vmatpush1.msra.mxu0 0.0
      %1162 = vmatprep.subr.mxu0 0.0
      %1163 = vmatpush1.msra.mxu0 0.0
      %1164 = vmatprep.subr.mxu0 0.0
      %1165 = vmatpush1.msra.mxu0 0.0
      %1166 = vmatprep.subr.mxu0 0.0
      %1167 = vmatpush1.msra.mxu0 0.0
      %1168 = vmatprep.subr.mxu0 0.0
      %1169 = vmatpush1.msra.mxu0 0.0
      %1170 = vmatprep.subr.mxu0 0.0
      %1171 = vmatpush1.msra.mxu0 0.0
      %1172 = vmatprep.subr.mxu0 0.0
      %1173 = vmatpush1.msra.mxu0 0.0
      %1174 = vmatprep.subr.mxu0 0.0
      %1175 = vmatpush1.msra.mxu0 0.0
      %1176 = vmatprep.subr.mxu0 0.0
      %1177 = vmatpush1.msra.mxu0 0.0
      %1178 = vmatprep.subr.mxu0 0.0
      %1179 = vmatpush1.msra.mxu0 0.0
      %1180 = vmatprep.subr.mxu0 0.0
      %1181 = vmatpush1.msra.mxu0 0.0
      %1182 = vmatprep.subr.mxu0 0.0
      %1183 = vmatpush1.msra.mxu0 0.0
      %1184 = vmatprep.subr.mxu0 0.0
      %1185 = vmatpush1.msra.mxu0 0.0
      %1186 = vmatprep.subr.mxu0 0.0
      %1187 = vmatpush1.msra.mxu0 0.0
      %1188 = vmatprep.subr.mxu0 0.0
      %1189 = vmatpush1.msra.mxu0 0.0
      %1190 = vmatprep.subr.mxu0 0.0
      %1191 = vmatpush1.msra.mxu0 0.0
      %1192 = vmatprep.mubr.f32.mxu0 0.0
      %1193 = vmatmul.mubr.f32.gmra.mrb[0].mxu0 %v1120
      %v1194 = vpop.f32.mrb[0].mxu0
      %v1195 = vadd.f32 0.0, %v1194
      %v1196 = vpop.f32.mrb[0].mxu0
      %v1197 = vadd.f32 0.0, %v1196
      %1198 = vdwg.mxu0
      %v1199 = vadd.f32 %v1093, %v1195
      %v1200 = vadd.f32 %v1094, %v1197
      %v1201 = vld [vmem:[%s2] sm:$0xf]
      %1203 = vset.pattern.permute.xlu0 0
      %1204 = vperm.xlu0 %1203, %v1201
      %v1205 = vpop.permute.xlu0 %1204
      %v1207 = vadd.f32 %v1199, %v1205
      %v1208 = vadd.f32 %v1200, %v1205
      %vm1209 = vcmp.gt.f32.partialorder %v1207, 0.0
      %vm1210 = vcmp.gt.f32.partialorder %v1208, 0.0
      %v1211 = vmul.f32 %v1207, 0.01
      %v1212 = vmul.f32 %v1208, 0.01
      %v1213 = vsel %vm1209, %v1207, %v1211
      %v1214 = vsel %vm1210, %v1208, %v1212
      %v1217 = vcombine.low %v1213, %v1214
      %1219 = vst [vmem:[%s262] sm:$0xff] %v1217
      %v1220 = vsel %vm325, %v1213, 0.0
      %v1221 = vsel %vm325, %v1214, 0.0
      %v1222 = vadd.f32 %v1220, %v1221
      %1223 = vadd.xlane.f32.xlu0 %v1222
      %v1224 = vpop.xlane.xlu0 %1223
      %v1225 = vmul.f32 %v1224, 0.00390625
      %v1226 = vsub.f32 %v1213, %v1225
      %v1227 = vsub.f32 %v1214, %v1225
      %v1228 = vmul.f32 %v1226, %v1226
      %v1229 = vmul.f32 %v1227, %v1227
      %v1230 = vsel %vm325, %v1228, 0.0
      %v1231 = vsel %vm325, %v1229, 0.0
      %v1232 = vadd.f32 %v1230, %v1231
      %1233 = vadd.xlane.f32.xlu0 %v1232
      %v1234 = vpop.xlane.xlu0 %1233
      %v1236 = vlaneseq
      %v1237 = vshrl.u32 %v1236, 7
      %v1238 = vsub.s32 %v278, %v1237
      %v1239 = vrot.slane %v1224, %v1238
      %vm1241 = vcmask 24576
      %1242 = vst.msk [vmem:[%s265] sm:$0x1] %vm1241, %v1239
      %v1244 = vlaneseq
      %v1245 = vshrl.u32 %v1244, 7
      %v1246 = vsub.s32 %v278, %v1245
      %v1247 = vrot.slane %v1234, %v1246
      %1249 = vst.msk [vmem:[%s268] sm:$0x1] %vm1241, %v1247
      %p1250 = scmp.lt.s32.totalorder %s18, 1
      %s1251 = scalar_select %p1250, %s18, 1
      %s1252 = smul.addr %s1251, 2
      %s1253 = smul.addr %s1252, 4
      %s1254 = scalar_lea.vmem %s4, %s1253
      %p1255 = scmp.lt.s32.totalorder %s18, 1
      %s1256 = scalar_select %p1255, %s18, 1
      %s1257 = scalar_lea.vmem %s5, %s1256
      %p1258 = scmp.lt.s32.totalorder %s18, 1
      %s1259 = scalar_select %p1258, %s18, 1
      %s1260 = scalar_lea.vmem %s6, %s1259
      // Predicated region
      $region37: #{conv_bridge_block.2} parent=35 // pred_check
        %p1261 = pneg %p125
      $region38: #{conv_bridge_block.2} parent=35 // pred_check_branch
        %1263 = sbr.rel (%p1261) target = $region40
      $region39: #{conv_bridge_block.2} parent=35 // pred_region
        _
      $region40: #{conv_bridge_block.2} parent=35 // pred_fallthru
        _
      // Predicated region
      $region41: #{conv_bridge_block.2} parent=35 // pred_check
        %p1264 = pneg %p151
      $region42: #{conv_bridge_block.2} parent=35 // pred_check_branch
        %1266 = sbr.rel (%p1264) target = $region44
      $region43: #{conv_bridge_block.2} parent=35 // pred_region
        _
      $region44: #{conv_bridge_block.2} parent=35 // pred_fallthru
        _
      // Predicated region
      $region45: #{conv_bridge_block.2} parent=35 // pred_check
        %p1267 = pneg %p177
      $region46: #{conv_bridge_block.2} parent=35 // pred_check_branch
        %1269 = sbr.rel (%p1267) target = $region48
      $region47: #{conv_bridge_block.2} parent=35 // pred_region
        _
      $region48: #{conv_bridge_block.2} parent=35 // pred_fallthru
        _
    $region36: #{conv_bridge_block.2} parent=5 // pred_fallthru
      _
    %p1270 = scmp.le.s32.totalorder 2, %s13
    // Predicated region
    $region49: #{conv_bridge_block.2} parent=5 // pred_check
      %p1271 = pneg %p1270
    $region50: #{conv_bridge_block.2} parent=5 // pred_check_branch
      %1273 = sbr.rel (%p1271) target = $region52
    $region51: #{conv_bridge_block.2} parent=5 // pred_region
      %s1274 = ssub.s32 %s13, 2
      // Predicated region
      $region53: #{conv_bridge_block.2} parent=51 // pred_check
        %p1275 = pneg %p131
      $region54: #{conv_bridge_block.2} parent=51 // pred_check_branch
        %1277 = sbr.rel (%p1275) target = $region56
      $region55: #{conv_bridge_block.2} parent=51 // pred_region
        %p1278 = scmp.lt.s32.totalorder %s19, 1
        %s1279 = scalar_select %p1278, %s19, 1
        %s1280 = smul.addr %s1279, 2
        %s1281 = smul.addr %s1280, 4
        %s1282 = scalar_lea.vmem %s4, %s1281
      $region56: #{conv_bridge_block.2} parent=51 // pred_fallthru
        _
      // Predicated region
      $region57: #{conv_bridge_block.2} parent=51 // pred_check
        %p1283 = pneg %p157
      $region58: #{conv_bridge_block.2} parent=51 // pred_check_branch
        %1285 = sbr.rel (%p1283) target = $region60
      $region59: #{conv_bridge_block.2} parent=51 // pred_region
        %p1286 = scmp.lt.s32.totalorder %s19, 1
        %s1287 = scalar_select %p1286, %s19, 1
        %s1288 = scalar_lea.vmem %s5, %s1287
      $region60: #{conv_bridge_block.2} parent=51 // pred_fallthru
        _
      // Predicated region
      $region61: #{conv_bridge_block.2} parent=51 // pred_check
        %p1289 = pneg %p183
      $region62: #{conv_bridge_block.2} parent=51 // pred_check_branch
        %1291 = sbr.rel (%p1289) target = $region64
      $region63: #{conv_bridge_block.2} parent=51 // pred_region
        %p1292 = scmp.lt.s32.totalorder %s19, 1
        %s1293 = scalar_select %p1292, %s19, 1
        %s1294 = scalar_lea.vmem %s6, %s1293
      $region64: #{conv_bridge_block.2} parent=51 // pred_fallthru
        _
    $region52: #{conv_bridge_block.2} parent=5 // pred_fallthru
      _
  $region6: #{conv_bridge_block.2} parent=0 // loop_footer
    %s17 = sadd.s32 1, %s13
  $region7: #{conv_bridge_block.2} parent=0 // loop_footer_branch
    %12 = sbr.rel target = $region3
  $region8: #{conv_bridge_block.2} parent=0 // loop_exit
    _

</llo_original>
